<compile_context>
chip_gen: v5e
topology: v5e:2x2
jax: 0.10.0
libtpu: 0.0.40
codegen_flags: <defaults>
</compile_context>

<pallas_src>
import jax
import jax.numpy as jnp
from jax import lax
from jax.experimental import pallas as pl
from jax.experimental.pallas import tpu as pltpu

# Per-gate qubit counts (i, f, g, o) for the cell variants in QModel.py.
GATE_QUBITS = {
    "classical": (5, 5, 5, 5),   # QLSTM            (StackedQLSTM default mode)
    "adjusted": (4, 5, 4, 3),    # AdjustedQLSTM
}


# ---------------------------------------------------------------------------
# Pallas kernel: one QLSTM layer, time-blocked.
# ---------------------------------------------------------------------------
def _qlstm_layer_kernel(x_ref, w_in_h_ref, w_in_x_ref, b_in_ref, w_out_ref,
                        b_out_ref, hseq_ref, h_out_ref, c_out_ref, h_sc, c_sc):
    tc = x_ref.shape[0]          # timesteps in this grid block (static)
    H = h_sc.shape[1]

    @pl.when(pl.program_id(0) == 0)
    def _():
        h_sc[...] = jnp.zeros_like(h_sc)
        c_sc[...] = jnp.zeros_like(c_sc)

    # Packed weights — loaded once per grid step, resident in VMEM.
    w_in_h = w_in_h_ref[...]     # (H, NQ)   acts on the h part of v_t=[h, x]
    w_in_x = w_in_x_ref[...]     # (I, NQ)   acts on the x part of v_t
    b_in = b_in_ref[...]         # (1, NQ)
    w_out = w_out_ref[...]       # (NQ, 4H)  block-diagonal over the 4 gates
    b_out = b_out_ref[...]       # (1, 4H)

    def step(t, carry):
        h_prev, c_prev = carry
        x_t = x_ref[t]           # (B, I)

        # qin Linear for all 4 gates at once:  z = [h, x] @ Wqin^T + bqin
        z = (jnp.dot(h_prev, w_in_h, preferred_element_type=jnp.float32)
             + jnp.dot(x_t, w_in_x, preferred_element_type=jnp.float32)
             + b_in)                                            # (B, NQ)
        # TODO(synk): variational quantum circuit omitted (identity surrogate).
        # qout Linear for all 4 gates (block-diagonal) -> lane-dense (B, 4H).
        gates = jnp.dot(z, w_out, preferred_element_type=jnp.float32) + b_out

        i_t = jax.nn.sigmoid(gates[:, 0 * H:1 * H])
        f_t = jax.nn.sigmoid(gates[:, 1 * H:2 * H])
        g_t = jnp.tanh(gates[:, 2 * H:3 * H])
        o_t = jax.nn.sigmoid(gates[:, 3 * H:4 * H])

        c_new = f_t * c_prev + i_t * g_t
        h_new = o_t * jnp.tanh(c_new)

        hseq_ref[t] = h_new
        return h_new, c_new

    h_last, c_last = lax.fori_loop(0, tc, step, (h_sc[...], c_sc[...]),
                                   unroll=True)

    # Persist recurrence state across grid steps; write final-state outputs
    # unconditionally (cheaper than predicating on the last step).
    h_sc[...] = h_last
    c_sc[...] = c_last
    h_out_ref[...] = h_last
    c_out_ref[...] = c_last


def qlstm_layer(x, packed, hidden_size, *, time_block=None):
    """One QLSTM layer.  x: (T, B, I) f32.  Returns ((T, B, H), (h_t, c_t))."""
    T, B, I = x.shape
    H = hidden_size
    tc = T if time_block is None else time_block
    assert T % tc == 0, "time_block must divide T"

    w_in_h, w_in_x, b_in, w_out, b_out = (
        packed["w_in_h"], packed["w_in_x"], packed["b_in"],
        packed["w_out"], packed["b_out"])

    in_specs = [
        pl.BlockSpec((tc, B, I), lambda i: (i, 0, 0)),
        pl.BlockSpec(w_in_h.shape, lambda i: (0, 0)),
        pl.BlockSpec(w_in_x.shape, lambda i: (0, 0)),
        pl.BlockSpec(b_in.shape, lambda i: (0, 0)),
        pl.BlockSpec(w_out.shape, lambda i: (0, 0)),
        pl.BlockSpec(b_out.shape, lambda i: (0, 0)),
    ]
    out_shape = (
        jax.ShapeDtypeStruct((T, B, H), jnp.float32),
        jax.ShapeDtypeStruct((B, H), jnp.float32),
        jax.ShapeDtypeStruct((B, H), jnp.float32),
    )
    out_specs = (
        pl.BlockSpec((tc, B, H), lambda i: (i, 0, 0)),
        pl.BlockSpec((B, H), lambda i: (0, 0)),
        pl.BlockSpec((B, H), lambda i: (0, 0)),
    )

    hseq, h_t, c_t = pl.pallas_call(
        _qlstm_layer_kernel,
        out_shape=out_shape,
        grid_spec=pltpu.PrefetchScalarGridSpec(
            num_scalar_prefetch=0,
            grid=(T // tc,),
            in_specs=in_specs,
            out_specs=out_specs,
            scratch_shapes=[
                pltpu.VMEM((B, H), jnp.float32),   # h state (carried)
                pltpu.VMEM((B, H), jnp.float32),   # c state (carried)
            ],
        ),
        compiler_params=pltpu.CompilerParams(
            dimension_semantics=("arbitrary",)),   # sequential time recurrence
    )(x, w_in_h, w_in_x, b_in, w_out, b_out)
    return hseq, (h_t, c_t)


def stacked_qlstm(x, layer_params, hidden_size, *, time_block=None):
    """StackedQLSTM forward.  x: (T, B, I).  Returns ((T*B, H), (h_t, c_t))."""
    T, B, _ = x.shape
    seq = x
    h_t = c_t = None
    for packed in layer_params:
        seq, (h_t, c_t) = qlstm_layer(seq, packed, hidden_size,
                                      time_block=time_block)
    return seq.reshape(T * B, hidden_size), (h_t, c_t)


# ---------------------------------------------------------------------------
# Parameter construction: PyTorch nn.Linear shapes, repacked + fused for TPU.
# ---------------------------------------------------------------------------
def make_layer_params(key, input_size, hidden_size, gate_qubits):
    """Returns (packed_params_dict, raw_per_gate_params, next_key)."""
    in_dim = input_size + hidden_size
    H = hidden_size
    nq_tot = sum(gate_qubits)

    raw = []
    w_in_h_parts, w_in_x_parts, b_in_parts, b_out_parts = [], [], [], []
    w_out = jnp.zeros((nq_tot, 4 * H), jnp.float32)
    off = 0
    for g, nq in enumerate(gate_qubits):
        key, k1, k2, k3, k4 = jax.random.split(key, 5)
        wqin = jax.random.normal(k1, (nq, in_dim), jnp.float32) * 0.1   # (out, in)
        bqin = jax.random.normal(k2, (nq,), jnp.float32) * 0.1
        wqout = jax.random.normal(k3, (H, nq), jnp.float32) * 0.1       # (out, in)
        bqout = jax.random.normal(k4, (H,), jnp.float32) * 0.1
        raw.append((wqin, bqin, wqout, bqout))

        wt = wqin.T                                  # (in_dim, nq); v = [h, x]
        w_in_h_parts.append(wt[:H])                  # (H, nq)
        w_in_x_parts.append(wt[H:])                  # (I, nq)
        b_in_parts.append(bqin)
        # block-diagonal qout: gate g only reads its own z slice.
        w_out = w_out.at[off:off + nq, g * H:(g + 1) * H].set(wqout.T)
        b_out_parts.append(bqout)
        off += nq

    packed = dict(
        w_in_h=jnp.concatenate(w_in_h_parts, axis=1),          # (H, NQ)
        w_in_x=jnp.concatenate(w_in_x_parts, axis=1),           # (I, NQ)
        b_in=jnp.concatenate(b_in_parts)[None, :],              # (1, NQ)
        w_out=w_out,                                            # (NQ, 4H)
        b_out=jnp.concatenate(b_out_parts)[None, :],            # (1, 4H)
    )
    return packed, raw, key


# ---------------------------------------------------------------------------
# Pure-JAX reference (un-fused, per-gate Linear layers) for correctness check.
# ---------------------------------------------------------------------------
def _qlstm_layer_ref(x, raw, hidden_size):
    T, B, _ = x.shape
    H = hidden_size
    h = jnp.zeros((B, H), jnp.float32)
    c = jnp.zeros((B, H), jnp.float32)
    hs = []
    for t in range(T):
        v = jnp.concatenate([h, x[t]], axis=1)
        outs = []
        for (wqin, bqin, wqout, bqout) in raw:
            z = v @ wqin.T + bqin
            outs.append(z @ wqout.T + bqout)
        i_t = jax.nn.sigmoid(outs[0])
        f_t = jax.nn.sigmoid(outs[1])
        g_t = jnp.tanh(outs[2])
        o_t = jax.nn.sigmoid(outs[3])
        c = f_t * c + i_t * g_t
        h = o_t * jnp.tanh(c)
        hs.append(h)
    return jnp.stack(hs, axis=0), (h, c)


def _stacked_ref(x, raw_layers, hidden_size):
    seq = x
    h = c = None
    for raw in raw_layers:
        seq, (h, c) = _qlstm_layer_ref(seq, raw, hidden_size)
    T, B, H = seq.shape
    return seq.reshape(T * B, H), (h, c)


if __name__ == "__main__":
    T, B, I, H = 8, 2, 4, 32
    NUM_LAYERS = 2
    MODE = "classical"           # StackedQLSTM default mode

    key = jax.random.PRNGKey(0)
    key, kx = jax.random.split(key)
    x = jax.random.normal(kx, (T, B, I), jnp.float32)

    gate_qubits = GATE_QUBITS[MODE]
    layer_params, raw_layers = [], []
    for layer in range(NUM_LAYERS):
        in_size = I if layer == 0 else H
        packed, raw, key = make_layer_params(key, in_size, H, gate_qubits)
        layer_params.append(packed)
        raw_layers.append(raw)

    hidden_sequence, (h_t, c_t) = stacked_qlstm(x, layer_params, H)
    jax.block_until_ready((hidden_sequence, h_t, c_t))

    assert hidden_sequence.shape == (T * B, H)
    assert h_t.shape == (B, H) and c_t.shape == (B, H)

    # Correctness check against the un-fused pure-JAX reference.
    ref_seq, (ref_h, ref_c) = _stacked_ref(x, raw_layers, H)
    assert jnp.allclose(hidden_sequence, ref_seq, rtol=5e-3, atol=5e-3)
    assert jnp.allclose(h_t, ref_h, rtol=5e-3, atol=5e-3)
    assert jnp.allclose(c_t, ref_c, rtol=5e-3, atol=5e-3)

    print("KERNEL_OK")
</pallas_src>

<mosaic_0001>
module attributes {stable_mosaic.version = 11 : i64} {
  func.func @_qlstm_layer_kernel(%arg0: i32, %arg1: memref<8x2x4xf32, #tpu.memory_space<vmem>>, %arg2: memref<32x20xf32, #tpu.memory_space<vmem>>, %arg3: memref<4x20xf32, #tpu.memory_space<vmem>>, %arg4: memref<1x20xf32, #tpu.memory_space<vmem>>, %arg5: memref<20x128xf32, #tpu.memory_space<vmem>>, %arg6: memref<1x128xf32, #tpu.memory_space<vmem>>, %arg7: memref<8x2x32xf32, #tpu.memory_space<vmem>>, %arg8: memref<2x32xf32, #tpu.memory_space<vmem>>, %arg9: memref<2x32xf32, #tpu.memory_space<vmem>>, %arg10: memref<2x32xf32, #tpu.memory_space<vmem>>, %arg11: memref<2x32xf32, #tpu.memory_space<vmem>>) attributes {dimension_semantics = [#tpu.dimension_semantics<arbitrary>], iteration_bounds = array<i64: 1>, scalar_prefetch = 0 : i64, scratch_operands = 2 : i64, tpu.core_type = #tpu.core_type<tc>, window_params = [{transform_indices = @transform_0, window_bounds = array<i64: 8, 2, 4>}, {pipeline_mode = #tpu.pipeline_mode<synchronous>, transform_indices = @transform_1, window_bounds = array<i64: 32, 20>}, {pipeline_mode = #tpu.pipeline_mode<synchronous>, transform_indices = @transform_2, window_bounds = array<i64: 4, 20>}, {pipeline_mode = #tpu.pipeline_mode<synchronous>, transform_indices = @transform_3, window_bounds = array<i64: 1, 20>}, {pipeline_mode = #tpu.pipeline_mode<synchronous>, transform_indices = @transform_4, window_bounds = array<i64: 20, 128>}, {pipeline_mode = #tpu.pipeline_mode<synchronous>, transform_indices = @transform_5, window_bounds = array<i64: 1, 128>}, {transform_indices = @transform_6, window_bounds = array<i64: 8, 2, 32>}, {pipeline_mode = #tpu.pipeline_mode<synchronous>, transform_indices = @transform_7, window_bounds = array<i64: 2, 32>}, {pipeline_mode = #tpu.pipeline_mode<synchronous>, transform_indices = @transform_8, window_bounds = array<i64: 2, 32>}]} {
    %c0_i32 = arith.constant 0 : i32
    %0 = arith.cmpi eq, %arg0, %c0_i32 : i32
    %1 = arith.extui %0 : i1 to i32
    %c0_i32_0 = arith.constant 0 : i32
    %2 = arith.cmpi ne, %1, %c0_i32_0 : i32
    scf.if %2 {
      %cst_102 = arith.constant 0.000000e+00 : f32
      %334 = vector.broadcast %cst_102 : f32 to vector<2x32xf32>
      %c0_103 = arith.constant 0 : index
      %c0_104 = arith.constant 0 : index
      %335 = vector.load %arg10[%c0_103, %c0_104] : memref<2x32xf32, #tpu.memory_space<vmem>>, vector<2x32xf32>
      tpu.vector_store %arg10[%c0_103, %c0_104], %334 {strides = array<i32>} : memref<2x32xf32, #tpu.memory_space<vmem>>, vector<2x32xf32>,
      %cst_105 = arith.constant 0.000000e+00 : f32
      %336 = vector.broadcast %cst_105 : f32 to vector<2x32xf32>
      %c0_106 = arith.constant 0 : index
      %c0_107 = arith.constant 0 : index
      %337 = vector.load %arg11[%c0_106, %c0_107] : memref<2x32xf32, #tpu.memory_space<vmem>>, vector<2x32xf32>
      tpu.vector_store %arg11[%c0_106, %c0_107], %336 {strides = array<i32>} : memref<2x32xf32, #tpu.memory_space<vmem>>, vector<2x32xf32>,
    } else {
    }
    %c0 = arith.constant 0 : index
    %c0_1 = arith.constant 0 : index
    %3 = vector.load %arg2[%c0, %c0_1] : memref<32x20xf32, #tpu.memory_space<vmem>>, vector<32x20xf32>
    %c0_2 = arith.constant 0 : index
    %c0_3 = arith.constant 0 : index
    %4 = vector.load %arg3[%c0_2, %c0_3] : memref<4x20xf32, #tpu.memory_space<vmem>>, vector<4x20xf32>
    %c0_4 = arith.constant 0 : index
    %c0_5 = arith.constant 0 : index
    %5 = vector.load %arg4[%c0_4, %c0_5] : memref<1x20xf32, #tpu.memory_space<vmem>>, vector<1x20xf32>
    %c0_6 = arith.constant 0 : index
    %c0_7 = arith.constant 0 : index
    %6 = vector.load %arg5[%c0_6, %c0_7] : memref<20x128xf32, #tpu.memory_space<vmem>>, vector<20x128xf32>
    %c0_8 = arith.constant 0 : index
    %c0_9 = arith.constant 0 : index
    %7 = vector.load %arg6[%c0_8, %c0_9] : memref<1x128xf32, #tpu.memory_space<vmem>>, vector<1x128xf32>
    %c0_10 = arith.constant 0 : index
    %c0_11 = arith.constant 0 : index
    %8 = vector.load %arg10[%c0_10, %c0_11] : memref<2x32xf32, #tpu.memory_space<vmem>>, vector<2x32xf32>
    %c0_12 = arith.constant 0 : index
    %c0_13 = arith.constant 0 : index
    %9 = vector.load %arg11[%c0_12, %c0_13] : memref<2x32xf32, #tpu.memory_space<vmem>>, vector<2x32xf32>
    %c0_i32_14 = arith.constant 0 : i32
    %10 = arith.index_cast %c0_i32_14 : i32 to index
    %c0_15 = arith.constant 0 : index
    %c0_16 = arith.constant 0 : index
    %11 = vector.load %arg1[%10, %c0_15, %c0_16] : memref<8x2x4xf32, #tpu.memory_space<vmem>>, vector<1x2x4xf32>
    %12 = vector.shape_cast %11 : vector<1x2x4xf32> to vector<2x4xf32>
    %cst = arith.constant dense<0.000000e+00> : vector<2x20xf32>
    %13 = tpu.matmul %8, %3, %cst {dimension_numbers = #tpu.dot_dimension_numbers<[1], [0], [0], [1], [0, 0, 1, 1], [], []>} : vector<2x32xf32>, vector<32x20xf32>, vector<2x20xf32> -> vector<2x20xf32>
    %cst_17 = arith.constant dense<0.000000e+00> : vector<2x20xf32>
    %14 = tpu.matmul %12, %4, %cst_17 {dimension_numbers = #tpu.dot_dimension_numbers<[1], [0], [0], [1], [0, 0, 1, 1], [], []>} : vector<2x4xf32>, vector<4x20xf32>, vector<2x20xf32> -> vector<2x20xf32>
    %15 = arith.addf %13, %14 : vector<2x20xf32>
    %16 = vector.broadcast %5 : vector<1x20xf32> to vector<2x20xf32>
    %17 = arith.addf %15, %16 : vector<2x20xf32>
    %cst_18 = arith.constant dense<0.000000e+00> : vector<2x128xf32>
    %18 = tpu.matmul %17, %6, %cst_18 {dimension_numbers = #tpu.dot_dimension_numbers<[1], [0], [0], [1], [0, 0, 1, 1], [], []>} : vector<2x20xf32>, vector<20x128xf32>, vector<2x128xf32> -> vector<2x128xf32>
    %19 = vector.broadcast %7 : vector<1x128xf32> to vector<2x128xf32>
    %20 = arith.addf %18, %19 : vector<2x128xf32>
    %21 = vector.extract_strided_slice %20 {offsets = [0, 0], sizes = [2, 32], strides = [1, 1]} : vector<2x128xf32> to vector<2x32xf32>
    %22 = arith.negf %21 : vector<2x32xf32>
    %23 = math.exp %22 : vector<2x32xf32>
    %cst_19 = arith.constant 1.000000e+00 : f32
    %24 = vector.broadcast %cst_19 : f32 to vector<2x32xf32>
    %25 = arith.addf %24, %23 : vector<2x32xf32>
    %26 = arith.divf %24, %25 : vector<2x32xf32>
    %27 = vector.extract_strided_slice %20 {offsets = [0, 32], sizes = [2, 32], strides = [1, 1]} : vector<2x128xf32> to vector<2x32xf32>
    %28 = arith.negf %27 : vector<2x32xf32>
    %29 = math.exp %28 : vector<2x32xf32>
    %cst_20 = arith.constant 1.000000e+00 : f32
    %30 = vector.broadcast %cst_20 : f32 to vector<2x32xf32>
    %31 = arith.addf %30, %29 : vector<2x32xf32>
    %32 = arith.divf %30, %31 : vector<2x32xf32>
    %33 = vector.extract_strided_slice %20 {offsets = [0, 64], sizes = [2, 32], strides = [1, 1]} : vector<2x128xf32> to vector<2x32xf32>
    %34 = math.tanh %33 : vector<2x32xf32>
    %35 = vector.extract_strided_slice %20 {offsets = [0, 96], sizes = [2, 32], strides = [1, 1]} : vector<2x128xf32> to vector<2x32xf32>
    %36 = arith.negf %35 : vector<2x32xf32>
    %37 = math.exp %36 : vector<2x32xf32>
    %cst_21 = arith.constant 1.000000e+00 : f32
    %38 = vector.broadcast %cst_21 : f32 to vector<2x32xf32>
    %39 = arith.addf %38, %37 : vector<2x32xf32>
    %40 = arith.divf %38, %39 : vector<2x32xf32>
    %41 = arith.mulf %32, %9 : vector<2x32xf32>
    %42 = arith.mulf %26, %34 : vector<2x32xf32>
    %43 = arith.addf %41, %42 : vector<2x32xf32>
    %44 = math.tanh %43 : vector<2x32xf32>
    %45 = arith.mulf %40, %44 : vector<2x32xf32>
    %46 = arith.index_cast %c0_i32_14 : i32 to index
    %c0_22 = arith.constant 0 : index
    %c0_23 = arith.constant 0 : index
    %47 = vector.load %arg7[%46, %c0_22, %c0_23] : memref<8x2x32xf32, #tpu.memory_space<vmem>>, vector<1x2x32xf32>
    %48 = vector.shape_cast %47 : vector<1x2x32xf32> to vector<2x32xf32>
    %49 = vector.shape_cast %45 : vector<2x32xf32> to vector<1x2x32xf32>
    tpu.vector_store %arg7[%46, %c0_22, %c0_23], %49 {strides = array<i32>} : memref<8x2x32xf32, #tpu.memory_space<vmem>>, vector<1x2x32xf32>,
    %c1_i32 = arith.constant 1 : i32
    %50 = arith.index_cast %c1_i32 : i32 to index
    %c0_24 = arith.constant 0 : index
    %c0_25 = arith.constant 0 : index
    %51 = vector.load %arg1[%50, %c0_24, %c0_25] : memref<8x2x4xf32, #tpu.memory_space<vmem>>, vector<1x2x4xf32>
    %52 = vector.shape_cast %51 : vector<1x2x4xf32> to vector<2x4xf32>
    %cst_26 = arith.constant dense<0.000000e+00> : vector<2x20xf32>
    %53 = tpu.matmul %45, %3, %cst_26 {dimension_numbers = #tpu.dot_dimension_numbers<[1], [0], [0], [1], [0, 0, 1, 1], [], []>} : vector<2x32xf32>, vector<32x20xf32>, vector<2x20xf32> -> vector<2x20xf32>
    %cst_27 = arith.constant dense<0.000000e+00> : vector<2x20xf32>
    %54 = tpu.matmul %52, %4, %cst_27 {dimension_numbers = #tpu.dot_dimension_numbers<[1], [0], [0], [1], [0, 0, 1, 1], [], []>} : vector<2x4xf32>, vector<4x20xf32>, vector<2x20xf32> -> vector<2x20xf32>
    %55 = arith.addf %53, %54 : vector<2x20xf32>
    %56 = vector.broadcast %5 : vector<1x20xf32> to vector<2x20xf32>
    %57 = arith.addf %55, %56 : vector<2x20xf32>
    %cst_28 = arith.constant dense<0.000000e+00> : vector<2x128xf32>
    %58 = tpu.matmul %57, %6, %cst_28 {dimension_numbers = #tpu.dot_dimension_numbers<[1], [0], [0], [1], [0, 0, 1, 1], [], []>} : vector<2x20xf32>, vector<20x128xf32>, vector<2x128xf32> -> vector<2x128xf32>
    %59 = vector.broadcast %7 : vector<1x128xf32> to vector<2x128xf32>
    %60 = arith.addf %58, %59 : vector<2x128xf32>
    %61 = vector.extract_strided_slice %60 {offsets = [0, 0], sizes = [2, 32], strides = [1, 1]} : vector<2x128xf32> to vector<2x32xf32>
    %62 = arith.negf %61 : vector<2x32xf32>
    %63 = math.exp %62 : vector<2x32xf32>
    %cst_29 = arith.constant 1.000000e+00 : f32
    %64 = vector.broadcast %cst_29 : f32 to vector<2x32xf32>
    %65 = arith.addf %64, %63 : vector<2x32xf32>
    %66 = arith.divf %64, %65 : vector<2x32xf32>
    %67 = vector.extract_strided_slice %60 {offsets = [0, 32], sizes = [2, 32], strides = [1, 1]} : vector<2x128xf32> to vector<2x32xf32>
    %68 = arith.negf %67 : vector<2x32xf32>
    %69 = math.exp %68 : vector<2x32xf32>
    %cst_30 = arith.constant 1.000000e+00 : f32
    %70 = vector.broadcast %cst_30 : f32 to vector<2x32xf32>
    %71 = arith.addf %70, %69 : vector<2x32xf32>
    %72 = arith.divf %70, %71 : vector<2x32xf32>
    %73 = vector.extract_strided_slice %60 {offsets = [0, 64], sizes = [2, 32], strides = [1, 1]} : vector<2x128xf32> to vector<2x32xf32>
    %74 = math.tanh %73 : vector<2x32xf32>
    %75 = vector.extract_strided_slice %60 {offsets = [0, 96], sizes = [2, 32], strides = [1, 1]} : vector<2x128xf32> to vector<2x32xf32>
    %76 = arith.negf %75 : vector<2x32xf32>
    %77 = math.exp %76 : vector<2x32xf32>
    %cst_31 = arith.constant 1.000000e+00 : f32
    %78 = vector.broadcast %cst_31 : f32 to vector<2x32xf32>
    %79 = arith.addf %78, %77 : vector<2x32xf32>
    %80 = arith.divf %78, %79 : vector<2x32xf32>
    %81 = arith.mulf %72, %43 : vector<2x32xf32>
    %82 = arith.mulf %66, %74 : vector<2x32xf32>
    %83 = arith.addf %81, %82 : vector<2x32xf32>
    %84 = math.tanh %83 : vector<2x32xf32>
    %85 = arith.mulf %80, %84 : vector<2x32xf32>
    %86 = arith.index_cast %c1_i32 : i32 to index
    %c0_32 = arith.constant 0 : index
    %c0_33 = arith.constant 0 : index
    %87 = vector.load %arg7[%86, %c0_32, %c0_33] : memref<8x2x32xf32, #tpu.memory_space<vmem>>, vector<1x2x32xf32>
    %88 = vector.shape_cast %87 : vector<1x2x32xf32> to vector<2x32xf32>
    %89 = vector.shape_cast %85 : vector<2x32xf32> to vector<1x2x32xf32>
    tpu.vector_store %arg7[%86, %c0_32, %c0_33], %89 {strides = array<i32>} : memref<8x2x32xf32, #tpu.memory_space<vmem>>, vector<1x2x32xf32>,
    %c2_i32 = arith.constant 2 : i32
    %90 = arith.index_cast %c2_i32 : i32 to index
    %c0_34 = arith.constant 0 : index
    %c0_35 = arith.constant 0 : index
    %91 = vector.load %arg1[%90, %c0_34, %c0_35] : memref<8x2x4xf32, #tpu.memory_space<vmem>>, vector<1x2x4xf32>
    %92 = vector.shape_cast %91 : vector<1x2x4xf32> to vector<2x4xf32>
    %cst_36 = arith.constant dense<0.000000e+00> : vector<2x20xf32>
    %93 = tpu.matmul %85, %3, %cst_36 {dimension_numbers = #tpu.dot_dimension_numbers<[1], [0], [0], [1], [0, 0, 1, 1], [], []>} : vector<2x32xf32>, vector<32x20xf32>, vector<2x20xf32> -> vector<2x20xf32>
    %cst_37 = arith.constant dense<0.000000e+00> : vector<2x20xf32>
    %94 = tpu.matmul %92, %4, %cst_37 {dimension_numbers = #tpu.dot_dimension_numbers<[1], [0], [0], [1], [0, 0, 1, 1], [], []>} : vector<2x4xf32>, vector<4x20xf32>, vector<2x20xf32> -> vector<2x20xf32>
    %95 = arith.addf %93, %94 : vector<2x20xf32>
    %96 = vector.broadcast %5 : vector<1x20xf32> to vector<2x20xf32>
    %97 = arith.addf %95, %96 : vector<2x20xf32>
    %cst_38 = arith.constant dense<0.000000e+00> : vector<2x128xf32>
    %98 = tpu.matmul %97, %6, %cst_38 {dimension_numbers = #tpu.dot_dimension_numbers<[1], [0], [0], [1], [0, 0, 1, 1], [], []>} : vector<2x20xf32>, vector<20x128xf32>, vector<2x128xf32> -> vector<2x128xf32>
    %99 = vector.broadcast %7 : vector<1x128xf32> to vector<2x128xf32>
    %100 = arith.addf %98, %99 : vector<2x128xf32>
    %101 = vector.extract_strided_slice %100 {offsets = [0, 0], sizes = [2, 32], strides = [1, 1]} : vector<2x128xf32> to vector<2x32xf32>
    %102 = arith.negf %101 : vector<2x32xf32>
    %103 = math.exp %102 : vector<2x32xf32>
    %cst_39 = arith.constant 1.000000e+00 : f32
    %104 = vector.broadcast %cst_39 : f32 to vector<2x32xf32>
    %105 = arith.addf %104, %103 : vector<2x32xf32>
    %106 = arith.divf %104, %105 : vector<2x32xf32>
    %107 = vector.extract_strided_slice %100 {offsets = [0, 32], sizes = [2, 32], strides = [1, 1]} : vector<2x128xf32> to vector<2x32xf32>
    %108 = arith.negf %107 : vector<2x32xf32>
    %109 = math.exp %108 : vector<2x32xf32>
    %cst_40 = arith.constant 1.000000e+00 : f32
    %110 = vector.broadcast %cst_40 : f32 to vector<2x32xf32>
    %111 = arith.addf %110, %109 : vector<2x32xf32>
    %112 = arith.divf %110, %111 : vector<2x32xf32>
    %113 = vector.extract_strided_slice %100 {offsets = [0, 64], sizes = [2, 32], strides = [1, 1]} : vector<2x128xf32> to vector<2x32xf32>
    %114 = math.tanh %113 : vector<2x32xf32>
    %115 = vector.extract_strided_slice %100 {offsets = [0, 96], sizes = [2, 32], strides = [1, 1]} : vector<2x128xf32> to vector<2x32xf32>
    %116 = arith.negf %115 : vector<2x32xf32>
    %117 = math.exp %116 : vector<2x32xf32>
    %cst_41 = arith.constant 1.000000e+00 : f32
    %118 = vector.broadcast %cst_41 : f32 to vector<2x32xf32>
    %119 = arith.addf %118, %117 : vector<2x32xf32>
    %120 = arith.divf %118, %119 : vector<2x32xf32>
    %121 = arith.mulf %112, %83 : vector<2x32xf32>
    %122 = arith.mulf %106, %114 : vector<2x32xf32>
    %123 = arith.addf %121, %122 : vector<2x32xf32>
    %124 = math.tanh %123 : vector<2x32xf32>
    %125 = arith.mulf %120, %124 : vector<2x32xf32>
    %126 = arith.index_cast %c2_i32 : i32 to index
    %c0_42 = arith.constant 0 : index
    %c0_43 = arith.constant 0 : index
    %127 = vector.load %arg7[%126, %c0_42, %c0_43] : memref<8x2x32xf32, #tpu.memory_space<vmem>>, vector<1x2x32xf32>
    %128 = vector.shape_cast %127 : vector<1x2x32xf32> to vector<2x32xf32>
    %129 = vector.shape_cast %125 : vector<2x32xf32> to vector<1x2x32xf32>
    tpu.vector_store %arg7[%126, %c0_42, %c0_43], %129 {strides = array<i32>} : memref<8x2x32xf32, #tpu.memory_space<vmem>>, vector<1x2x32xf32>,
    %c3_i32 = arith.constant 3 : i32
    %130 = arith.index_cast %c3_i32 : i32 to index
    %c0_44 = arith.constant 0 : index
    %c0_45 = arith.constant 0 : index
    %131 = vector.load %arg1[%130, %c0_44, %c0_45] : memref<8x2x4xf32, #tpu.memory_space<vmem>>, vector<1x2x4xf32>
    %132 = vector.shape_cast %131 : vector<1x2x4xf32> to vector<2x4xf32>
    %cst_46 = arith.constant dense<0.000000e+00> : vector<2x20xf32>
    %133 = tpu.matmul %125, %3, %cst_46 {dimension_numbers = #tpu.dot_dimension_numbers<[1], [0], [0], [1], [0, 0, 1, 1], [], []>} : vector<2x32xf32>, vector<32x20xf32>, vector<2x20xf32> -> vector<2x20xf32>
    %cst_47 = arith.constant dense<0.000000e+00> : vector<2x20xf32>
    %134 = tpu.matmul %132, %4, %cst_47 {dimension_numbers = #tpu.dot_dimension_numbers<[1], [0], [0], [1], [0, 0, 1, 1], [], []>} : vector<2x4xf32>, vector<4x20xf32>, vector<2x20xf32> -> vector<2x20xf32>
    %135 = arith.addf %133, %134 : vector<2x20xf32>
    %136 = vector.broadcast %5 : vector<1x20xf32> to vector<2x20xf32>
    %137 = arith.addf %135, %136 : vector<2x20xf32>
    %cst_48 = arith.constant dense<0.000000e+00> : vector<2x128xf32>
    %138 = tpu.matmul %137, %6, %cst_48 {dimension_numbers = #tpu.dot_dimension_numbers<[1], [0], [0], [1], [0, 0, 1, 1], [], []>} : vector<2x20xf32>, vector<20x128xf32>, vector<2x128xf32> -> vector<2x128xf32>
    %139 = vector.broadcast %7 : vector<1x128xf32> to vector<2x128xf32>
    %140 = arith.addf %138, %139 : vector<2x128xf32>
    %141 = vector.extract_strided_slice %140 {offsets = [0, 0], sizes = [2, 32], strides = [1, 1]} : vector<2x128xf32> to vector<2x32xf32>
    %142 = arith.negf %141 : vector<2x32xf32>
    %143 = math.exp %142 : vector<2x32xf32>
    %cst_49 = arith.constant 1.000000e+00 : f32
    %144 = vector.broadcast %cst_49 : f32 to vector<2x32xf32>
    %145 = arith.addf %144, %143 : vector<2x32xf32>
    %146 = arith.divf %144, %145 : vector<2x32xf32>
    %147 = vector.extract_strided_slice %140 {offsets = [0, 32], sizes = [2, 32], strides = [1, 1]} : vector<2x128xf32> to vector<2x32xf32>
    %148 = arith.negf %147 : vector<2x32xf32>
    %149 = math.exp %148 : vector<2x32xf32>
    %cst_50 = arith.constant 1.000000e+00 : f32
    %150 = vector.broadcast %cst_50 : f32 to vector<2x32xf32>
    %151 = arith.addf %150, %149 : vector<2x32xf32>
    %152 = arith.divf %150, %151 : vector<2x32xf32>
    %153 = vector.extract_strided_slice %140 {offsets = [0, 64], sizes = [2, 32], strides = [1, 1]} : vector<2x128xf32> to vector<2x32xf32>
    %154 = math.tanh %153 : vector<2x32xf32>
    %155 = vector.extract_strided_slice %140 {offsets = [0, 96], sizes = [2, 32], strides = [1, 1]} : vector<2x128xf32> to vector<2x32xf32>
    %156 = arith.negf %155 : vector<2x32xf32>
    %157 = math.exp %156 : vector<2x32xf32>
    %cst_51 = arith.constant 1.000000e+00 : f32
    %158 = vector.broadcast %cst_51 : f32 to vector<2x32xf32>
    %159 = arith.addf %158, %157 : vector<2x32xf32>
    %160 = arith.divf %158, %159 : vector<2x32xf32>
    %161 = arith.mulf %152, %123 : vector<2x32xf32>
    %162 = arith.mulf %146, %154 : vector<2x32xf32>
    %163 = arith.addf %161, %162 : vector<2x32xf32>
    %164 = math.tanh %163 : vector<2x32xf32>
    %165 = arith.mulf %160, %164 : vector<2x32xf32>
    %166 = arith.index_cast %c3_i32 : i32 to index
    %c0_52 = arith.constant 0 : index
    %c0_53 = arith.constant 0 : index
    %167 = vector.load %arg7[%166, %c0_52, %c0_53] : memref<8x2x32xf32, #tpu.memory_space<vmem>>, vector<1x2x32xf32>
    %168 = vector.shape_cast %167 : vector<1x2x32xf32> to vector<2x32xf32>
    %169 = vector.shape_cast %165 : vector<2x32xf32> to vector<1x2x32xf32>
    tpu.vector_store %arg7[%166, %c0_52, %c0_53], %169 {strides = array<i32>} : memref<8x2x32xf32, #tpu.memory_space<vmem>>, vector<1x2x32xf32>,
    %c4_i32 = arith.constant 4 : i32
    %170 = arith.index_cast %c4_i32 : i32 to index
    %c0_54 = arith.constant 0 : index
    %c0_55 = arith.constant 0 : index
    %171 = vector.load %arg1[%170, %c0_54, %c0_55] : memref<8x2x4xf32, #tpu.memory_space<vmem>>, vector<1x2x4xf32>
    %172 = vector.shape_cast %171 : vector<1x2x4xf32> to vector<2x4xf32>
    %cst_56 = arith.constant dense<0.000000e+00> : vector<2x20xf32>
    %173 = tpu.matmul %165, %3, %cst_56 {dimension_numbers = #tpu.dot_dimension_numbers<[1], [0], [0], [1], [0, 0, 1, 1], [], []>} : vector<2x32xf32>, vector<32x20xf32>, vector<2x20xf32> -> vector<2x20xf32>
    %cst_57 = arith.constant dense<0.000000e+00> : vector<2x20xf32>
    %174 = tpu.matmul %172, %4, %cst_57 {dimension_numbers = #tpu.dot_dimension_numbers<[1], [0], [0], [1], [0, 0, 1, 1], [], []>} : vector<2x4xf32>, vector<4x20xf32>, vector<2x20xf32> -> vector<2x20xf32>
    %175 = arith.addf %173, %174 : vector<2x20xf32>
    %176 = vector.broadcast %5 : vector<1x20xf32> to vector<2x20xf32>
    %177 = arith.addf %175, %176 : vector<2x20xf32>
    %cst_58 = arith.constant dense<0.000000e+00> : vector<2x128xf32>
    %178 = tpu.matmul %177, %6, %cst_58 {dimension_numbers = #tpu.dot_dimension_numbers<[1], [0], [0], [1], [0, 0, 1, 1], [], []>} : vector<2x20xf32>, vector<20x128xf32>, vector<2x128xf32> -> vector<2x128xf32>
    %179 = vector.broadcast %7 : vector<1x128xf32> to vector<2x128xf32>
    %180 = arith.addf %178, %179 : vector<2x128xf32>
    %181 = vector.extract_strided_slice %180 {offsets = [0, 0], sizes = [2, 32], strides = [1, 1]} : vector<2x128xf32> to vector<2x32xf32>
    %182 = arith.negf %181 : vector<2x32xf32>
    %183 = math.exp %182 : vector<2x32xf32>
    %cst_59 = arith.constant 1.000000e+00 : f32
    %184 = vector.broadcast %cst_59 : f32 to vector<2x32xf32>
    %185 = arith.addf %184, %183 : vector<2x32xf32>
    %186 = arith.divf %184, %185 : vector<2x32xf32>
    %187 = vector.extract_strided_slice %180 {offsets = [0, 32], sizes = [2, 32], strides = [1, 1]} : vector<2x128xf32> to vector<2x32xf32>
    %188 = arith.negf %187 : vector<2x32xf32>
    %189 = math.exp %188 : vector<2x32xf32>
    %cst_60 = arith.constant 1.000000e+00 : f32
    %190 = vector.broadcast %cst_60 : f32 to vector<2x32xf32>
    %191 = arith.addf %190, %189 : vector<2x32xf32>
    %192 = arith.divf %190, %191 : vector<2x32xf32>
    %193 = vector.extract_strided_slice %180 {offsets = [0, 64], sizes = [2, 32], strides = [1, 1]} : vector<2x128xf32> to vector<2x32xf32>
    %194 = math.tanh %193 : vector<2x32xf32>
    %195 = vector.extract_strided_slice %180 {offsets = [0, 96], sizes = [2, 32], strides = [1, 1]} : vector<2x128xf32> to vector<2x32xf32>
    %196 = arith.negf %195 : vector<2x32xf32>
    %197 = math.exp %196 : vector<2x32xf32>
    %cst_61 = arith.constant 1.000000e+00 : f32
    %198 = vector.broadcast %cst_61 : f32 to vector<2x32xf32>
    %199 = arith.addf %198, %197 : vector<2x32xf32>
    %200 = arith.divf %198, %199 : vector<2x32xf32>
    %201 = arith.mulf %192, %163 : vector<2x32xf32>
    %202 = arith.mulf %186, %194 : vector<2x32xf32>
    %203 = arith.addf %201, %202 : vector<2x32xf32>
    %204 = math.tanh %203 : vector<2x32xf32>
    %205 = arith.mulf %200, %204 : vector<2x32xf32>
    %206 = arith.index_cast %c4_i32 : i32 to index
    %c0_62 = arith.constant 0 : index
    %c0_63 = arith.constant 0 : index
    %207 = vector.load %arg7[%206, %c0_62, %c0_63] : memref<8x2x32xf32, #tpu.memory_space<vmem>>, vector<1x2x32xf32>
    %208 = vector.shape_cast %207 : vector<1x2x32xf32> to vector<2x32xf32>
    %209 = vector.shape_cast %205 : vector<2x32xf32> to vector<1x2x32xf32>
    tpu.vector_store %arg7[%206, %c0_62, %c0_63], %209 {strides = array<i32>} : memref<8x2x32xf32, #tpu.memory_space<vmem>>, vector<1x2x32xf32>,
    %c5_i32 = arith.constant 5 : i32
    %210 = arith.index_cast %c5_i32 : i32 to index
    %c0_64 = arith.constant 0 : index
    %c0_65 = arith.constant 0 : index
    %211 = vector.load %arg1[%210, %c0_64, %c0_65] : memref<8x2x4xf32, #tpu.memory_space<vmem>>, vector<1x2x4xf32>
    %212 = vector.shape_cast %211 : vector<1x2x4xf32> to vector<2x4xf32>
    %cst_66 = arith.constant dense<0.000000e+00> : vector<2x20xf32>
    %213 = tpu.matmul %205, %3, %cst_66 {dimension_numbers = #tpu.dot_dimension_numbers<[1], [0], [0], [1], [0, 0, 1, 1], [], []>} : vector<2x32xf32>, vector<32x20xf32>, vector<2x20xf32> -> vector<2x20xf32>
    %cst_67 = arith.constant dense<0.000000e+00> : vector<2x20xf32>
    %214 = tpu.matmul %212, %4, %cst_67 {dimension_numbers = #tpu.dot_dimension_numbers<[1], [0], [0], [1], [0, 0, 1, 1], [], []>} : vector<2x4xf32>, vector<4x20xf32>, vector<2x20xf32> -> vector<2x20xf32>
    %215 = arith.addf %213, %214 : vector<2x20xf32>
    %216 = vector.broadcast %5 : vector<1x20xf32> to vector<2x20xf32>
    %217 = arith.addf %215, %216 : vector<2x20xf32>
    %cst_68 = arith.constant dense<0.000000e+00> : vector<2x128xf32>
    %218 = tpu.matmul %217, %6, %cst_68 {dimension_numbers = #tpu.dot_dimension_numbers<[1], [0], [0], [1], [0, 0, 1, 1], [], []>} : vector<2x20xf32>, vector<20x128xf32>, vector<2x128xf32> -> vector<2x128xf32>
    %219 = vector.broadcast %7 : vector<1x128xf32> to vector<2x128xf32>
    %220 = arith.addf %218, %219 : vector<2x128xf32>
    %221 = vector.extract_strided_slice %220 {offsets = [0, 0], sizes = [2, 32], strides = [1, 1]} : vector<2x128xf32> to vector<2x32xf32>
    %222 = arith.negf %221 : vector<2x32xf32>
    %223 = math.exp %222 : vector<2x32xf32>
    %cst_69 = arith.constant 1.000000e+00 : f32
    %224 = vector.broadcast %cst_69 : f32 to vector<2x32xf32>
    %225 = arith.addf %224, %223 : vector<2x32xf32>
    %226 = arith.divf %224, %225 : vector<2x32xf32>
    %227 = vector.extract_strided_slice %220 {offsets = [0, 32], sizes = [2, 32], strides = [1, 1]} : vector<2x128xf32> to vector<2x32xf32>
    %228 = arith.negf %227 : vector<2x32xf32>
    %229 = math.exp %228 : vector<2x32xf32>
    %cst_70 = arith.constant 1.000000e+00 : f32
    %230 = vector.broadcast %cst_70 : f32 to vector<2x32xf32>
    %231 = arith.addf %230, %229 : vector<2x32xf32>
    %232 = arith.divf %230, %231 : vector<2x32xf32>
    %233 = vector.extract_strided_slice %220 {offsets = [0, 64], sizes = [2, 32], strides = [1, 1]} : vector<2x128xf32> to vector<2x32xf32>
    %234 = math.tanh %233 : vector<2x32xf32>
    %235 = vector.extract_strided_slice %220 {offsets = [0, 96], sizes = [2, 32], strides = [1, 1]} : vector<2x128xf32> to vector<2x32xf32>
    %236 = arith.negf %235 : vector<2x32xf32>
    %237 = math.exp %236 : vector<2x32xf32>
    %cst_71 = arith.constant 1.000000e+00 : f32
    %238 = vector.broadcast %cst_71 : f32 to vector<2x32xf32>
    %239 = arith.addf %238, %237 : vector<2x32xf32>
    %240 = arith.divf %238, %239 : vector<2x32xf32>
    %241 = arith.mulf %232, %203 : vector<2x32xf32>
    %242 = arith.mulf %226, %234 : vector<2x32xf32>
    %243 = arith.addf %241, %242 : vector<2x32xf32>
    %244 = math.tanh %243 : vector<2x32xf32>
    %245 = arith.mulf %240, %244 : vector<2x32xf32>
    %246 = arith.index_cast %c5_i32 : i32 to index
    %c0_72 = arith.constant 0 : index
    %c0_73 = arith.constant 0 : index
    %247 = vector.load %arg7[%246, %c0_72, %c0_73] : memref<8x2x32xf32, #tpu.memory_space<vmem>>, vector<1x2x32xf32>
    %248 = vector.shape_cast %247 : vector<1x2x32xf32> to vector<2x32xf32>
    %249 = vector.shape_cast %245 : vector<2x32xf32> to vector<1x2x32xf32>
    tpu.vector_store %arg7[%246, %c0_72, %c0_73], %249 {strides = array<i32>} : memref<8x2x32xf32, #tpu.memory_space<vmem>>, vector<1x2x32xf32>,
    %c6_i32 = arith.constant 6 : i32
    %250 = arith.index_cast %c6_i32 : i32 to index
    %c0_74 = arith.constant 0 : index
    %c0_75 = arith.constant 0 : index
    %251 = vector.load %arg1[%250, %c0_74, %c0_75] : memref<8x2x4xf32, #tpu.memory_space<vmem>>, vector<1x2x4xf32>
    %252 = vector.shape_cast %251 : vector<1x2x4xf32> to vector<2x4xf32>
    %cst_76 = arith.constant dense<0.000000e+00> : vector<2x20xf32>
    %253 = tpu.matmul %245, %3, %cst_76 {dimension_numbers = #tpu.dot_dimension_numbers<[1], [0], [0], [1], [0, 0, 1, 1], [], []>} : vector<2x32xf32>, vector<32x20xf32>, vector<2x20xf32> -> vector<2x20xf32>
    %cst_77 = arith.constant dense<0.000000e+00> : vector<2x20xf32>
    %254 = tpu.matmul %252, %4, %cst_77 {dimension_numbers = #tpu.dot_dimension_numbers<[1], [0], [0], [1], [0, 0, 1, 1], [], []>} : vector<2x4xf32>, vector<4x20xf32>, vector<2x20xf32> -> vector<2x20xf32>
    %255 = arith.addf %253, %254 : vector<2x20xf32>
    %256 = vector.broadcast %5 : vector<1x20xf32> to vector<2x20xf32>
    %257 = arith.addf %255, %256 : vector<2x20xf32>
    %cst_78 = arith.constant dense<0.000000e+00> : vector<2x128xf32>
    %258 = tpu.matmul %257, %6, %cst_78 {dimension_numbers = #tpu.dot_dimension_numbers<[1], [0], [0], [1], [0, 0, 1, 1], [], []>} : vector<2x20xf32>, vector<20x128xf32>, vector<2x128xf32> -> vector<2x128xf32>
    %259 = vector.broadcast %7 : vector<1x128xf32> to vector<2x128xf32>
    %260 = arith.addf %258, %259 : vector<2x128xf32>
    %261 = vector.extract_strided_slice %260 {offsets = [0, 0], sizes = [2, 32], strides = [1, 1]} : vector<2x128xf32> to vector<2x32xf32>
    %262 = arith.negf %261 : vector<2x32xf32>
    %263 = math.exp %262 : vector<2x32xf32>
    %cst_79 = arith.constant 1.000000e+00 : f32
    %264 = vector.broadcast %cst_79 : f32 to vector<2x32xf32>
    %265 = arith.addf %264, %263 : vector<2x32xf32>
    %266 = arith.divf %264, %265 : vector<2x32xf32>
    %267 = vector.extract_strided_slice %260 {offsets = [0, 32], sizes = [2, 32], strides = [1, 1]} : vector<2x128xf32> to vector<2x32xf32>
    %268 = arith.negf %267 : vector<2x32xf32>
    %269 = math.exp %268 : vector<2x32xf32>
    %cst_80 = arith.constant 1.000000e+00 : f32
    %270 = vector.broadcast %cst_80 : f32 to vector<2x32xf32>
    %271 = arith.addf %270, %269 : vector<2x32xf32>
    %272 = arith.divf %270, %271 : vector<2x32xf32>
    %273 = vector.extract_strided_slice %260 {offsets = [0, 64], sizes = [2, 32], strides = [1, 1]} : vector<2x128xf32> to vector<2x32xf32>
    %274 = math.tanh %273 : vector<2x32xf32>
    %275 = vector.extract_strided_slice %260 {offsets = [0, 96], sizes = [2, 32], strides = [1, 1]} : vector<2x128xf32> to vector<2x32xf32>
    %276 = arith.negf %275 : vector<2x32xf32>
    %277 = math.exp %276 : vector<2x32xf32>
    %cst_81 = arith.constant 1.000000e+00 : f32
    %278 = vector.broadcast %cst_81 : f32 to vector<2x32xf32>
    %279 = arith.addf %278, %277 : vector<2x32xf32>
    %280 = arith.divf %278, %279 : vector<2x32xf32>
    %281 = arith.mulf %272, %243 : vector<2x32xf32>
    %282 = arith.mulf %266, %274 : vector<2x32xf32>
    %283 = arith.addf %281, %282 : vector<2x32xf32>
    %284 = math.tanh %283 : vector<2x32xf32>
    %285 = arith.mulf %280, %284 : vector<2x32xf32>
    %286 = arith.index_cast %c6_i32 : i32 to index
    %c0_82 = arith.constant 0 : index
    %c0_83 = arith.constant 0 : index
    %287 = vector.load %arg7[%286, %c0_82, %c0_83] : memref<8x2x32xf32, #tpu.memory_space<vmem>>, vector<1x2x32xf32>
    %288 = vector.shape_cast %287 : vector<1x2x32xf32> to vector<2x32xf32>
    %289 = vector.shape_cast %285 : vector<2x32xf32> to vector<1x2x32xf32>
    tpu.vector_store %arg7[%286, %c0_82, %c0_83], %289 {strides = array<i32>} : memref<8x2x32xf32, #tpu.memory_space<vmem>>, vector<1x2x32xf32>,
    %c7_i32 = arith.constant 7 : i32
    %290 = arith.index_cast %c7_i32 : i32 to index
    %c0_84 = arith.constant 0 : index
    %c0_85 = arith.constant 0 : index
    %291 = vector.load %arg1[%290, %c0_84, %c0_85] : memref<8x2x4xf32, #tpu.memory_space<vmem>>, vector<1x2x4xf32>
    %292 = vector.shape_cast %291 : vector<1x2x4xf32> to vector<2x4xf32>
    %cst_86 = arith.constant dense<0.000000e+00> : vector<2x20xf32>
    %293 = tpu.matmul %285, %3, %cst_86 {dimension_numbers = #tpu.dot_dimension_numbers<[1], [0], [0], [1], [0, 0, 1, 1], [], []>} : vector<2x32xf32>, vector<32x20xf32>, vector<2x20xf32> -> vector<2x20xf32>
    %cst_87 = arith.constant dense<0.000000e+00> : vector<2x20xf32>
    %294 = tpu.matmul %292, %4, %cst_87 {dimension_numbers = #tpu.dot_dimension_numbers<[1], [0], [0], [1], [0, 0, 1, 1], [], []>} : vector<2x4xf32>, vector<4x20xf32>, vector<2x20xf32> -> vector<2x20xf32>
    %295 = arith.addf %293, %294 : vector<2x20xf32>
    %296 = vector.broadcast %5 : vector<1x20xf32> to vector<2x20xf32>
    %297 = arith.addf %295, %296 : vector<2x20xf32>
    %cst_88 = arith.constant dense<0.000000e+00> : vector<2x128xf32>
    %298 = tpu.matmul %297, %6, %cst_88 {dimension_numbers = #tpu.dot_dimension_numbers<[1], [0], [0], [1], [0, 0, 1, 1], [], []>} : vector<2x20xf32>, vector<20x128xf32>, vector<2x128xf32> -> vector<2x128xf32>
    %299 = vector.broadcast %7 : vector<1x128xf32> to vector<2x128xf32>
    %300 = arith.addf %298, %299 : vector<2x128xf32>
    %301 = vector.extract_strided_slice %300 {offsets = [0, 0], sizes = [2, 32], strides = [1, 1]} : vector<2x128xf32> to vector<2x32xf32>
    %302 = arith.negf %301 : vector<2x32xf32>
    %303 = math.exp %302 : vector<2x32xf32>
    %cst_89 = arith.constant 1.000000e+00 : f32
    %304 = vector.broadcast %cst_89 : f32 to vector<2x32xf32>
    %305 = arith.addf %304, %303 : vector<2x32xf32>
    %306 = arith.divf %304, %305 : vector<2x32xf32>
    %307 = vector.extract_strided_slice %300 {offsets = [0, 32], sizes = [2, 32], strides = [1, 1]} : vector<2x128xf32> to vector<2x32xf32>
    %308 = arith.negf %307 : vector<2x32xf32>
    %309 = math.exp %308 : vector<2x32xf32>
    %cst_90 = arith.constant 1.000000e+00 : f32
    %310 = vector.broadcast %cst_90 : f32 to vector<2x32xf32>
    %311 = arith.addf %310, %309 : vector<2x32xf32>
    %312 = arith.divf %310, %311 : vector<2x32xf32>
    %313 = vector.extract_strided_slice %300 {offsets = [0, 64], sizes = [2, 32], strides = [1, 1]} : vector<2x128xf32> to vector<2x32xf32>
    %314 = math.tanh %313 : vector<2x32xf32>
    %315 = vector.extract_strided_slice %300 {offsets = [0, 96], sizes = [2, 32], strides = [1, 1]} : vector<2x128xf32> to vector<2x32xf32>
    %316 = arith.negf %315 : vector<2x32xf32>
    %317 = math.exp %316 : vector<2x32xf32>
    %cst_91 = arith.constant 1.000000e+00 : f32
    %318 = vector.broadcast %cst_91 : f32 to vector<2x32xf32>
    %319 = arith.addf %318, %317 : vector<2x32xf32>
    %320 = arith.divf %318, %319 : vector<2x32xf32>
    %321 = arith.mulf %312, %283 : vector<2x32xf32>
    %322 = arith.mulf %306, %314 : vector<2x32xf32>
    %323 = arith.addf %321, %322 : vector<2x32xf32>
    %324 = math.tanh %323 : vector<2x32xf32>
    %325 = arith.mulf %320, %324 : vector<2x32xf32>
    %326 = arith.index_cast %c7_i32 : i32 to index
    %c0_92 = arith.constant 0 : index
    %c0_93 = arith.constant 0 : index
    %327 = vector.load %arg7[%326, %c0_92, %c0_93] : memref<8x2x32xf32, #tpu.memory_space<vmem>>, vector<1x2x32xf32>
    %328 = vector.shape_cast %327 : vector<1x2x32xf32> to vector<2x32xf32>
    %329 = vector.shape_cast %325 : vector<2x32xf32> to vector<1x2x32xf32>
    tpu.vector_store %arg7[%326, %c0_92, %c0_93], %329 {strides = array<i32>} : memref<8x2x32xf32, #tpu.memory_space<vmem>>, vector<1x2x32xf32>,
    %c8_i32 = arith.constant 8 : i32
    %c0_94 = arith.constant 0 : index
    %c0_95 = arith.constant 0 : index
    %330 = vector.load %arg10[%c0_94, %c0_95] : memref<2x32xf32, #tpu.memory_space<vmem>>, vector<2x32xf32>
    tpu.vector_store %arg10[%c0_94, %c0_95], %325 {strides = array<i32>} : memref<2x32xf32, #tpu.memory_space<vmem>>, vector<2x32xf32>,
    %c0_96 = arith.constant 0 : index
    %c0_97 = arith.constant 0 : index
    %331 = vector.load %arg11[%c0_96, %c0_97] : memref<2x32xf32, #tpu.memory_space<vmem>>, vector<2x32xf32>
    tpu.vector_store %arg11[%c0_96, %c0_97], %323 {strides = array<i32>} : memref<2x32xf32, #tpu.memory_space<vmem>>, vector<2x32xf32>,
    %c0_98 = arith.constant 0 : index
    %c0_99 = arith.constant 0 : index
    %332 = vector.load %arg8[%c0_98, %c0_99] : memref<2x32xf32, #tpu.memory_space<vmem>>, vector<2x32xf32>
    tpu.vector_store %arg8[%c0_98, %c0_99], %325 {strides = array<i32>} : memref<2x32xf32, #tpu.memory_space<vmem>>, vector<2x32xf32>,
    %c0_100 = arith.constant 0 : index
    %c0_101 = arith.constant 0 : index
    %333 = vector.load %arg9[%c0_100, %c0_101] : memref<2x32xf32, #tpu.memory_space<vmem>>, vector<2x32xf32>
    tpu.vector_store %arg9[%c0_100, %c0_101], %323 {strides = array<i32>} : memref<2x32xf32, #tpu.memory_space<vmem>>, vector<2x32xf32>,
    return
  }
  func.func @transform_0(%arg0: i32) -> (i32, i32, i32) {
    %c0_i32 = arith.constant 0 : i32
    %c0_i32_0 = arith.constant 0 : i32
    %c0_i32_1 = arith.constant 0 : i32
    return %arg0, %c0_i32, %c0_i32_0 : i32, i32, i32
  }
  func.func @transform_1(%arg0: i32) -> (i32, i32) {
    %c0_i32 = arith.constant 0 : i32
    %c0_i32_0 = arith.constant 0 : i32
    %c0_i32_1 = arith.constant 0 : i32
    return %c0_i32, %c0_i32_0 : i32, i32
  }
  func.func @transform_2(%arg0: i32) -> (i32, i32) {
    %c0_i32 = arith.constant 0 : i32
    %c0_i32_0 = arith.constant 0 : i32
    %c0_i32_1 = arith.constant 0 : i32
    return %c0_i32, %c0_i32_0 : i32, i32
  }
  func.func @transform_3(%arg0: i32) -> (i32, i32) {
    %c0_i32 = arith.constant 0 : i32
    %c0_i32_0 = arith.constant 0 : i32
    %c0_i32_1 = arith.constant 0 : i32
    return %c0_i32, %c0_i32_0 : i32, i32
  }
  func.func @transform_4(%arg0: i32) -> (i32, i32) {
    %c0_i32 = arith.constant 0 : i32
    %c0_i32_0 = arith.constant 0 : i32
    %c0_i32_1 = arith.constant 0 : i32
    return %c0_i32, %c0_i32_0 : i32, i32
  }
  func.func @transform_5(%arg0: i32) -> (i32, i32) {
    %c0_i32 = arith.constant 0 : i32
    %c0_i32_0 = arith.constant 0 : i32
    %c0_i32_1 = arith.constant 0 : i32
    return %c0_i32, %c0_i32_0 : i32, i32
  }
  func.func @transform_6(%arg0: i32) -> (i32, i32, i32) {
    %c0_i32 = arith.constant 0 : i32
    %c0_i32_0 = arith.constant 0 : i32
    %c0_i32_1 = arith.constant 0 : i32
    return %arg0, %c0_i32, %c0_i32_0 : i32, i32, i32
  }
  func.func @transform_7(%arg0: i32) -> (i32, i32) {
    %c0_i32 = arith.constant 0 : i32
    %c0_i32_0 = arith.constant 0 : i32
    %c0_i32_1 = arith.constant 0 : i32
    return %c0_i32, %c0_i32_0 : i32, i32
  }
  func.func @transform_8(%arg0: i32) -> (i32, i32) {
    %c0_i32 = arith.constant 0 : i32
    %c0_i32_0 = arith.constant 0 : i32
    %c0_i32_1 = arith.constant 0 : i32
    return %c0_i32, %c0_i32_0 : i32, i32
  }
}

</mosaic_0001>

<llo_original>
// kernel: tpu_custom_call.1
$region0: #{tpu_custom_call.1}
  #allocation0 [shape = 'u32[]', space=smem, size = 0x4, offset = 0x4, fixed_abs, tag = 'smem constant byte address 0x4 - core index']
  #allocation1 [shape = 'u32[72,128]{1,0:T(1,128)}', space=vmem, size = 0x9000, scoped, tag = 'internal scratch']
  #allocation2 [shape = 'f32[2,32]{1,0:T(2,128)}', space=vmem, size = 0x400, scoped, tag = 'scratch operand']
  #allocation3 [shape = 'f32[2,32]{1,0:T(2,128)}', space=vmem, size = 0x400, scoped, tag = 'scratch operand']
  %s0 = inlined_call_operand.vmem [shape: f32[8,2,4], index: 0, kind: input, shape index: {}]
  %s1 = inlined_call_operand.vmem [shape: f32[32,20], index: 1, kind: input, shape index: {}]
  %s2 = inlined_call_operand.vmem [shape: f32[4,20], index: 2, kind: input, shape index: {}]
  %s3 = inlined_call_operand.vmem [shape: f32[1,20], index: 3, kind: input, shape index: {}]
  %s4 = inlined_call_operand.vmem [shape: f32[20,128], index: 4, kind: input, shape index: {}]
  %s5 = inlined_call_operand.vmem [shape: f32[1,128], index: 5, kind: input, shape index: {}]
  %s6 = inlined_call_operand.hbm [shape: f32[8,2,32], index: 6, kind: output, shape index: {0}]
  %s7 = inlined_call_operand.hbm [shape: f32[2,32], index: 7, kind: output, shape index: {1}]
  %s8 = inlined_call_operand.hbm [shape: f32[2,32], index: 8, kind: output, shape index: {2}]
  %9 = xla_tuple %s6, %s7, %s8
  %s10 = sld [smem:[#allocation0]]
  $region54: #{tpu_custom_call.1} parent=0
    _
  %s12 = ssub.s32 1, %s10
  %s13 = scalar_select 0, %s12, %s10
  $region1: #{tpu_custom_call.1} parent=0
    #allocation4 [shape = 'u8[8192]{0}', space=vmem, size = 0x2000, scoped, tag = 'output window, operand 0, single buffered']
    #allocation5 [shape = 's32[1]{0}', space=sflag, size = 0x4, scoped, tag = 'scoped memory for tpu_custom_call.1']
    #allocation6 [shape = 'u8[1024]{0}', space=vmem, size = 0x400, scoped, tag = 'output window, operand 1, single buffered']
    #allocation7 [shape = 's32[1]{0}', space=sflag, size = 0x4, scoped, tag = 'scoped memory for tpu_custom_call.1']
    #allocation8 [shape = 'u8[1024]{0}', space=vmem, size = 0x400, scoped, tag = 'output window, operand 2, single buffered']
    %14 = vsyncpa [#allocation5], 0
    %15 = vsyncpa [#allocation7], 0
    // Predicated region
    $region2: #{tpu_custom_call.1} parent=1 // pred_check
      _
    $region3: #{tpu_custom_call.1} parent=1 // pred_check_branch
      %17 = sbr.rel (0) target = $region5
    $region4: #{tpu_custom_call.1} parent=1 // pred_region
      _
    $region5: #{tpu_custom_call.1} parent=1 // pred_fallthru
      _
    // Predicated region
    $region6: #{tpu_custom_call.1} parent=1 // pred_check
      _
    $region7: #{tpu_custom_call.1} parent=1 // pred_check_branch
      %19 = sbr.rel (0) target = $region9
    $region8: #{tpu_custom_call.1} parent=1 // pred_region
      _
    $region9: #{tpu_custom_call.1} parent=1 // pred_fallthru
      _
    // Predicated region
    $region10: #{tpu_custom_call.1} parent=1 // pred_check
      _
    $region11: #{tpu_custom_call.1} parent=1 // pred_check_branch
      %21 = sbr.rel (0) target = $region13
    $region12: #{tpu_custom_call.1} parent=1 // pred_region
      _
    $region13: #{tpu_custom_call.1} parent=1 // pred_fallthru
      _
    // Predicated region
    $region14: #{tpu_custom_call.1} parent=1 // pred_check
      _
    $region15: #{tpu_custom_call.1} parent=1 // pred_check_branch
      %23 = sbr.rel (0) target = $region17
    $region16: #{tpu_custom_call.1} parent=1 // pred_region
      _
    $region17: #{tpu_custom_call.1} parent=1 // pred_fallthru
      _
    // Predicated region
    $region18: #{tpu_custom_call.1} parent=1 // pred_check
      _
    $region19: #{tpu_custom_call.1} parent=1 // pred_check_branch
      %25 = sbr.rel (0) target = $region21
    $region20: #{tpu_custom_call.1} parent=1 // pred_region
      _
    $region21: #{tpu_custom_call.1} parent=1 // pred_fallthru
      _
    // Predicated region
    $region22: #{tpu_custom_call.1} parent=1 // pred_check
      _
    $region23: #{tpu_custom_call.1} parent=1 // pred_check_branch
      %27 = sbr.rel (0) target = $region25
    $region24: #{tpu_custom_call.1} parent=1 // pred_region
      _
    $region25: #{tpu_custom_call.1} parent=1 // pred_fallthru
      _
    %p28 = scmp.eq.s32.totalorder 0, 0
    // Predicated region
    $region26: #{tpu_custom_call.1} parent=1 // pred_check
      %p29 = pneg %p28
    $region27: #{tpu_custom_call.1} parent=1 // pred_check_branch
      %31 = sbr.rel (%p29) target = $region29
    $region28: #{tpu_custom_call.1} parent=1 // pred_region
      %vm32 = vcmask 254976
      %33 = vst.msk [vmem:[#allocation2] sm:$0x3] %vm32, 0.0
      %34 = vst.msk [vmem:[#allocation3] sm:$0x3] %vm32, 0.0
    $region29: #{tpu_custom_call.1} parent=1 // pred_fallthru
      _
    %v35 = vld [vmem:[%s1] sm:$0xff]
    %v36 = vld [vmem:[%s1 + $0x8] sm:$0xff]
    %v37 = vld [vmem:[%s1 + $0x10] sm:$0xff]
    %v38 = vld [vmem:[%s1 + $0x18] sm:$0xff]
    %v39 = vld [vmem:[%s2] sm:$0xf]
    %v40 = vld [vmem:[%s3] sm:$0x1]
    %v41 = vld [vmem:[%s4] sm:$0xff]
    %v42 = vld [vmem:[%s4 + $0x8] sm:$0xff]
    %v43 = vld [vmem:[%s4 + $0x10] sm:$0xf]
    %v44 = vld [vmem:[%s5] sm:$0x1]
    %v45 = vld [vmem:[#allocation2] sm:$0x3]
    %v46 = vld [vmem:[#allocation3] sm:$0x3]
    %v47 = vld [vmem:[%s0] sm:$0x3]
    %vm48 = vcmask 31744
    %v50 = vsel %vm48, %v47, 0
    %vm52 = vcmask 1043456
    %v54 = vsel %vm52, %v39, 0
    %56 = vmatpush.msra.mxu0 0.0
    %57 = vmatpush.msra.mxu0 0.0
    %58 = vmatpush.msra.mxu0 0.0
    %59 = vmatpush.msra.mxu0 0.0
    %60 = vmatpush.msra.mxu0 0.0
    %61 = vmatpush.msra.mxu0 0.0
    %62 = vmatpush.msra.mxu0 0.0
    %63 = vmatpush.msra.mxu0 0.0
    %64 = vmatpush.msra.mxu0 0.0
    %65 = vmatpush.msra.mxu0 0.0
    %66 = vmatpush.msra.mxu0 0.0
    %67 = vmatpush.msra.mxu0 0.0
    %68 = vmatpush.msra.mxu0 0.0
    %69 = vmatpush.msra.mxu0 0.0
    %70 = vmatpush.msra.mxu0 0.0
    %71 = vmatpush.msra.mxu0 %v54
    %72 = vmatmul.f32.gmra.mxu0 %v50
    %v73 = vpop.f32.mrf.mxu0
    %v74 = vadd.f32 0.0, %v73
    %75 = vdwg.mxu0
    %vm76 = vcmask 261120
    %v78 = vsel %vm76, %v45, 0
    %80 = vmatpush.msra.mxu0 0.0
    %81 = vmatpush.msra.mxu0 0.0
    %82 = vmatpush.msra.mxu0 0.0
    %83 = vmatpush.msra.mxu0 0.0
    %84 = vmatpush.msra.mxu0 0.0
    %85 = vmatpush.msra.mxu0 0.0
    %86 = vmatpush.msra.mxu0 0.0
    %87 = vmatpush.msra.mxu0 0.0
    %88 = vmatpush.msra.mxu0 0.0
    %89 = vmatpush.msra.mxu0 0.0
    %90 = vmatpush.msra.mxu0 0.0
    %91 = vmatpush.msra.mxu0 0.0
    %92 = vmatpush.msra.mxu0 %v38
    %93 = vmatpush.msra.mxu0 %v37
    %94 = vmatpush.msra.mxu0 %v36
    %95 = vmatpush.msra.mxu0 %v35
    %96 = vmatmul.f32.gmra.mxu0 %v78
    %v97 = vpop.f32.mrf.mxu0
    %v98 = vadd.f32 %v74, %v97
    %99 = vdwg.mxu0
    %v101 = vperm.slane %v40, 0
    %v103 = vadd.f32 %v98, %v101
    %v105 = vperm.slane %v44, 0
    %vm107 = vcmask 162816
    %v109 = vsel %vm107, %v103, 0
    %v112 = vsel %vm52, %v43, 0
    %114 = vmatpush.msra.mxu0 0.0
    %115 = vmatpush.msra.mxu0 0.0
    %116 = vmatpush.msra.mxu0 0.0
    %117 = vmatpush.msra.mxu0 0.0
    %118 = vmatpush.msra.mxu0 0.0
    %119 = vmatpush.msra.mxu0 0.0
    %120 = vmatpush.msra.mxu0 0.0
    %121 = vmatpush.msra.mxu0 0.0
    %122 = vmatpush.msra.mxu0 0.0
    %123 = vmatpush.msra.mxu0 0.0
    %124 = vmatpush.msra.mxu0 0.0
    %125 = vmatpush.msra.mxu0 0.0
    %126 = vmatpush.msra.mxu0 0.0
    %127 = vmatpush.msra.mxu0 %v112
    %128 = vmatpush.msra.mxu0 %v42
    %129 = vmatpush.msra.mxu0 %v41
    %130 = vmatmul.f32.gmra.mxu0 %v109
    %v131 = vpop.f32.mrf.mxu0
    %v132 = vadd.f32 %v105, %v131
    %133 = vdwg.mxu0
    %v134 = vxor.u32 %v132, 2147483648
    %v135 = vmul.f32 %v134, 1.442695
    %v136 = vpow.pop %v135
    %v137 = vadd.f32 %v136, 1.0
    %v138 = vrcp.pop %v137
    %v139 = vmul.f32 %v137, %v138
    %v140 = vsub.f32 1.0, %v139
    %v141 = vmul.f32 %v138, %v140
    %v142 = vadd.f32 %v138, %v141
    %vm143 = vweird.f32 %v137
    %vm144 = vweird.f32 %v138
    %vm145 = vmor %vm143, %vm144
    %v146 = vsel %vm145, %v138, %v142
    %v147 = vand.u32 2147483647, %v137
    %vm148 = vcmp.eq.f32.partialorder %v147, 8.507059e+37
    %v149 = vand.u32 %v137, 2147483648
    %v150 = vor.u32 1.1754944e-38, %v149
    %v151 = vsel %vm148, %v150, %v146
    %v152 = vmul.f32 1.0, %v151
    %v153 = vtanh.pop %v132
    %155 = vrot.lane.b32.xlu0 %v46, 32
    %v156 = vpop.permute.xlu0 %155
    %v158 = vmul.f32 %v152, %v156
    %160 = vrot.lane.b32.xlu0 %v153, 64
    %v161 = vpop.permute.xlu0 %160
    %v163 = vmul.f32 %v152, %v161
    %165 = vrot.lane.b32.xlu0 %v163, 32
    %v166 = vpop.permute.xlu0 %165
    %v168 = vadd.f32 %v158, %v166
    %v169 = vtanh.pop %v168
    %171 = vrot.lane.b32.xlu0 %v169, 64
    %v172 = vpop.permute.xlu0 %171
    %v174 = vmul.f32 %v152, %v172
    %176 = vrot.lane.b32.xlu0 %v174, 32
    %v177 = vpop.permute.xlu0 %176
    %vm179 = vcmask 254976
    %180 = vst.msk [vmem:[#allocation4] sm:$0x3] %vm179, %v177
    %s181 = scalar_lea.vmem %s0, 2
    %v182 = vld [vmem:[%s181] sm:$0x3]
    %v184 = vsel %vm48, %v182, 0
    %186 = vmatpush.msra.mxu0 0.0
    %187 = vmatpush.msra.mxu0 0.0
    %188 = vmatpush.msra.mxu0 0.0
    %189 = vmatpush.msra.mxu0 0.0
    %190 = vmatpush.msra.mxu0 0.0
    %191 = vmatpush.msra.mxu0 0.0
    %192 = vmatpush.msra.mxu0 0.0
    %193 = vmatpush.msra.mxu0 0.0
    %194 = vmatpush.msra.mxu0 0.0
    %195 = vmatpush.msra.mxu0 0.0
    %196 = vmatpush.msra.mxu0 0.0
    %197 = vmatpush.msra.mxu0 0.0
    %198 = vmatpush.msra.mxu0 0.0
    %199 = vmatpush.msra.mxu0 0.0
    %200 = vmatpush.msra.mxu0 0.0
    %201 = vmatpush.msra.mxu0 %v54
    %202 = vmatmul.f32.gmra.mxu0 %v184
    %v203 = vpop.f32.mrf.mxu0
    %v204 = vadd.f32 0.0, %v203
    %205 = vdwg.mxu0
    %v206 = vsel %vm76, %v177, 0
    %208 = vmatpush.msra.mxu0 0.0
    %209 = vmatpush.msra.mxu0 0.0
    %210 = vmatpush.msra.mxu0 0.0
    %211 = vmatpush.msra.mxu0 0.0
    %212 = vmatpush.msra.mxu0 0.0
    %213 = vmatpush.msra.mxu0 0.0
    %214 = vmatpush.msra.mxu0 0.0
    %215 = vmatpush.msra.mxu0 0.0
    %216 = vmatpush.msra.mxu0 0.0
    %217 = vmatpush.msra.mxu0 0.0
    %218 = vmatpush.msra.mxu0 0.0
    %219 = vmatpush.msra.mxu0 0.0
    %220 = vmatpush.msra.mxu0 %v38
    %221 = vmatpush.msra.mxu0 %v37
    %222 = vmatpush.msra.mxu0 %v36
    %223 = vmatpush.msra.mxu0 %v35
    %224 = vmatmul.f32.gmra.mxu0 %v206
    %v225 = vpop.f32.mrf.mxu0
    %v226 = vadd.f32 %v204, %v225
    %227 = vdwg.mxu0
    %v228 = vadd.f32 %v226, %v101
    %v230 = vsel %vm107, %v228, 0
    %232 = vmatpush.msra.mxu0 0.0
    %233 = vmatpush.msra.mxu0 0.0
    %234 = vmatpush.msra.mxu0 0.0
    %235 = vmatpush.msra.mxu0 0.0
    %236 = vmatpush.msra.mxu0 0.0
    %237 = vmatpush.msra.mxu0 0.0
    %238 = vmatpush.msra.mxu0 0.0
    %239 = vmatpush.msra.mxu0 0.0
    %240 = vmatpush.msra.mxu0 0.0
    %241 = vmatpush.msra.mxu0 0.0
    %242 = vmatpush.msra.mxu0 0.0
    %243 = vmatpush.msra.mxu0 0.0
    %244 = vmatpush.msra.mxu0 0.0
    %245 = vmatpush.msra.mxu0 %v112
    %246 = vmatpush.msra.mxu0 %v42
    %247 = vmatpush.msra.mxu0 %v41
    %248 = vmatmul.f32.gmra.mxu0 %v230
    %v249 = vpop.f32.mrf.mxu0
    %v250 = vadd.f32 %v105, %v249
    %251 = vdwg.mxu0
    %v252 = vxor.u32 %v250, 2147483648
    %v253 = vmul.f32 %v252, 1.442695
    %v254 = vpow.pop %v253
    %v255 = vadd.f32 %v254, 1.0
    %v256 = vrcp.pop %v255
    %v257 = vmul.f32 %v255, %v256
    %v258 = vsub.f32 1.0, %v257
    %v259 = vmul.f32 %v256, %v258
    %v260 = vadd.f32 %v256, %v259
    %vm261 = vweird.f32 %v255
    %vm262 = vweird.f32 %v256
    %vm263 = vmor %vm261, %vm262
    %v264 = vsel %vm263, %v256, %v260
    %v265 = vand.u32 2147483647, %v255
    %vm266 = vcmp.eq.f32.partialorder %v265, 8.507059e+37
    %v267 = vand.u32 %v255, 2147483648
    %v268 = vor.u32 1.1754944e-38, %v267
    %v269 = vsel %vm266, %v268, %v264
    %v270 = vmul.f32 1.0, %v269
    %v271 = vtanh.pop %v250
    %v272 = vmul.f32 %v270, %v168
    %274 = vrot.lane.b32.xlu0 %v271, 64
    %v275 = vpop.permute.xlu0 %274
    %v277 = vmul.f32 %v270, %v275
    %279 = vrot.lane.b32.xlu0 %v277, 32
    %v280 = vpop.permute.xlu0 %279
    %v282 = vadd.f32 %v272, %v280
    %v283 = vtanh.pop %v282
    %285 = vrot.lane.b32.xlu0 %v283, 64
    %v286 = vpop.permute.xlu0 %285
    %v288 = vmul.f32 %v270, %v286
    %290 = vrot.lane.b32.xlu0 %v288, 32
    %v291 = vpop.permute.xlu0 %290
    %s293 = scalar_lea.vmem [#allocation4], 2
    %294 = vst.msk [vmem:[%s293] sm:$0x3] %vm179, %v291
    %s295 = scalar_lea.vmem %s0, 4
    %v296 = vld [vmem:[%s295] sm:$0x3]
    %v298 = vsel %vm48, %v296, 0
    %300 = vmatpush.msra.mxu0 0.0
    %301 = vmatpush.msra.mxu0 0.0
    %302 = vmatpush.msra.mxu0 0.0
    %303 = vmatpush.msra.mxu0 0.0
    %304 = vmatpush.msra.mxu0 0.0
    %305 = vmatpush.msra.mxu0 0.0
    %306 = vmatpush.msra.mxu0 0.0
    %307 = vmatpush.msra.mxu0 0.0
    %308 = vmatpush.msra.mxu0 0.0
    %309 = vmatpush.msra.mxu0 0.0
    %310 = vmatpush.msra.mxu0 0.0
    %311 = vmatpush.msra.mxu0 0.0
    %312 = vmatpush.msra.mxu0 0.0
    %313 = vmatpush.msra.mxu0 0.0
    %314 = vmatpush.msra.mxu0 0.0
    %315 = vmatpush.msra.mxu0 %v54
    %316 = vmatmul.f32.gmra.mxu0 %v298
    %v317 = vpop.f32.mrf.mxu0
    %v318 = vadd.f32 0.0, %v317
    %319 = vdwg.mxu0
    %v320 = vsel %vm76, %v291, 0
    %322 = vmatpush.msra.mxu0 0.0
    %323 = vmatpush.msra.mxu0 0.0
    %324 = vmatpush.msra.mxu0 0.0
    %325 = vmatpush.msra.mxu0 0.0
    %326 = vmatpush.msra.mxu0 0.0
    %327 = vmatpush.msra.mxu0 0.0
    %328 = vmatpush.msra.mxu0 0.0
    %329 = vmatpush.msra.mxu0 0.0
    %330 = vmatpush.msra.mxu0 0.0
    %331 = vmatpush.msra.mxu0 0.0
    %332 = vmatpush.msra.mxu0 0.0
    %333 = vmatpush.msra.mxu0 0.0
    %334 = vmatpush.msra.mxu0 %v38
    %335 = vmatpush.msra.mxu0 %v37
    %336 = vmatpush.msra.mxu0 %v36
    %337 = vmatpush.msra.mxu0 %v35
    %338 = vmatmul.f32.gmra.mxu0 %v320
    %v339 = vpop.f32.mrf.mxu0
    %v340 = vadd.f32 %v318, %v339
    %341 = vdwg.mxu0
    %v342 = vadd.f32 %v340, %v101
    %v344 = vsel %vm107, %v342, 0
    %346 = vmatpush.msra.mxu0 0.0
    %347 = vmatpush.msra.mxu0 0.0
    %348 = vmatpush.msra.mxu0 0.0
    %349 = vmatpush.msra.mxu0 0.0
    %350 = vmatpush.msra.mxu0 0.0
    %351 = vmatpush.msra.mxu0 0.0
    %352 = vmatpush.msra.mxu0 0.0
    %353 = vmatpush.msra.mxu0 0.0
    %354 = vmatpush.msra.mxu0 0.0
    %355 = vmatpush.msra.mxu0 0.0
    %356 = vmatpush.msra.mxu0 0.0
    %357 = vmatpush.msra.mxu0 0.0
    %358 = vmatpush.msra.mxu0 0.0
    %359 = vmatpush.msra.mxu0 %v112
    %360 = vmatpush.msra.mxu0 %v42
    %361 = vmatpush.msra.mxu0 %v41
    %362 = vmatmul.f32.gmra.mxu0 %v344
    %v363 = vpop.f32.mrf.mxu0
    %v364 = vadd.f32 %v105, %v363
    %365 = vdwg.mxu0
    %v366 = vxor.u32 %v364, 2147483648
    %v367 = vmul.f32 %v366, 1.442695
    %v368 = vpow.pop %v367
    %v369 = vadd.f32 %v368, 1.0
    %v370 = vrcp.pop %v369
    %v371 = vmul.f32 %v369, %v370
    %v372 = vsub.f32 1.0, %v371
    %v373 = vmul.f32 %v370, %v372
    %v374 = vadd.f32 %v370, %v373
    %vm375 = vweird.f32 %v369
    %vm376 = vweird.f32 %v370
    %vm377 = vmor %vm375, %vm376
    %v378 = vsel %vm377, %v370, %v374
    %v379 = vand.u32 2147483647, %v369
    %vm380 = vcmp.eq.f32.partialorder %v379, 8.507059e+37
    %v381 = vand.u32 %v369, 2147483648
    %v382 = vor.u32 1.1754944e-38, %v381
    %v383 = vsel %vm380, %v382, %v378
    %v384 = vmul.f32 1.0, %v383
    %v385 = vtanh.pop %v364
    %v386 = vmul.f32 %v384, %v282
    %388 = vrot.lane.b32.xlu0 %v385, 64
    %v389 = vpop.permute.xlu0 %388
    %v391 = vmul.f32 %v384, %v389
    %393 = vrot.lane.b32.xlu0 %v391, 32
    %v394 = vpop.permute.xlu0 %393
    %v396 = vadd.f32 %v386, %v394
    %v397 = vtanh.pop %v396
    %399 = vrot.lane.b32.xlu0 %v397, 64
    %v400 = vpop.permute.xlu0 %399
    %v402 = vmul.f32 %v384, %v400
    %404 = vrot.lane.b32.xlu0 %v402, 32
    %v405 = vpop.permute.xlu0 %404
    %s407 = scalar_lea.vmem [#allocation4], 4
    %408 = vst.msk [vmem:[%s407] sm:$0x3] %vm179, %v405
    %s409 = scalar_lea.vmem %s0, 6
    %v410 = vld [vmem:[%s409] sm:$0x3]
    %v412 = vsel %vm48, %v410, 0
    %414 = vmatpush.msra.mxu0 0.0
    %415 = vmatpush.msra.mxu0 0.0
    %416 = vmatpush.msra.mxu0 0.0
    %417 = vmatpush.msra.mxu0 0.0
    %418 = vmatpush.msra.mxu0 0.0
    %419 = vmatpush.msra.mxu0 0.0
    %420 = vmatpush.msra.mxu0 0.0
    %421 = vmatpush.msra.mxu0 0.0
    %422 = vmatpush.msra.mxu0 0.0
    %423 = vmatpush.msra.mxu0 0.0
    %424 = vmatpush.msra.mxu0 0.0
    %425 = vmatpush.msra.mxu0 0.0
    %426 = vmatpush.msra.mxu0 0.0
    %427 = vmatpush.msra.mxu0 0.0
    %428 = vmatpush.msra.mxu0 0.0
    %429 = vmatpush.msra.mxu0 %v54
    %430 = vmatmul.f32.gmra.mxu0 %v412
    %v431 = vpop.f32.mrf.mxu0
    %v432 = vadd.f32 0.0, %v431
    %433 = vdwg.mxu0
    %v434 = vsel %vm76, %v405, 0
    %436 = vmatpush.msra.mxu0 0.0
    %437 = vmatpush.msra.mxu0 0.0
    %438 = vmatpush.msra.mxu0 0.0
    %439 = vmatpush.msra.mxu0 0.0
    %440 = vmatpush.msra.mxu0 0.0
    %441 = vmatpush.msra.mxu0 0.0
    %442 = vmatpush.msra.mxu0 0.0
    %443 = vmatpush.msra.mxu0 0.0
    %444 = vmatpush.msra.mxu0 0.0
    %445 = vmatpush.msra.mxu0 0.0
    %446 = vmatpush.msra.mxu0 0.0
    %447 = vmatpush.msra.mxu0 0.0
    %448 = vmatpush.msra.mxu0 %v38
    %449 = vmatpush.msra.mxu0 %v37
    %450 = vmatpush.msra.mxu0 %v36
    %451 = vmatpush.msra.mxu0 %v35
    %452 = vmatmul.f32.gmra.mxu0 %v434
    %v453 = vpop.f32.mrf.mxu0
    %v454 = vadd.f32 %v432, %v453
    %455 = vdwg.mxu0
    %v456 = vadd.f32 %v454, %v101
    %v458 = vsel %vm107, %v456, 0
    %460 = vmatpush.msra.mxu0 0.0
    %461 = vmatpush.msra.mxu0 0.0
    %462 = vmatpush.msra.mxu0 0.0
    %463 = vmatpush.msra.mxu0 0.0
    %464 = vmatpush.msra.mxu0 0.0
    %465 = vmatpush.msra.mxu0 0.0
    %466 = vmatpush.msra.mxu0 0.0
    %467 = vmatpush.msra.mxu0 0.0
    %468 = vmatpush.msra.mxu0 0.0
    %469 = vmatpush.msra.mxu0 0.0
    %470 = vmatpush.msra.mxu0 0.0
    %471 = vmatpush.msra.mxu0 0.0
    %472 = vmatpush.msra.mxu0 0.0
    %473 = vmatpush.msra.mxu0 %v112
    %474 = vmatpush.msra.mxu0 %v42
    %475 = vmatpush.msra.mxu0 %v41
    %476 = vmatmul.f32.gmra.mxu0 %v458
    %v477 = vpop.f32.mrf.mxu0
    %v478 = vadd.f32 %v105, %v477
    %479 = vdwg.mxu0
    %v480 = vxor.u32 %v478, 2147483648
    %v481 = vmul.f32 %v480, 1.442695
    %v482 = vpow.pop %v481
    %v483 = vadd.f32 %v482, 1.0
    %v484 = vrcp.pop %v483
    %v485 = vmul.f32 %v483, %v484
    %v486 = vsub.f32 1.0, %v485
    %v487 = vmul.f32 %v484, %v486
    %v488 = vadd.f32 %v484, %v487
    %vm489 = vweird.f32 %v483
    %vm490 = vweird.f32 %v484
    %vm491 = vmor %vm489, %vm490
    %v492 = vsel %vm491, %v484, %v488
    %v493 = vand.u32 2147483647, %v483
    %vm494 = vcmp.eq.f32.partialorder %v493, 8.507059e+37
    %v495 = vand.u32 %v483, 2147483648
    %v496 = vor.u32 1.1754944e-38, %v495
    %v497 = vsel %vm494, %v496, %v492
    %v498 = vmul.f32 1.0, %v497
    %v499 = vtanh.pop %v478
    %v500 = vmul.f32 %v498, %v396
    %502 = vrot.lane.b32.xlu0 %v499, 64
    %v503 = vpop.permute.xlu0 %502
    %v505 = vmul.f32 %v498, %v503
    %507 = vrot.lane.b32.xlu0 %v505, 32
    %v508 = vpop.permute.xlu0 %507
    %v510 = vadd.f32 %v500, %v508
    %v511 = vtanh.pop %v510
    %513 = vrot.lane.b32.xlu0 %v511, 64
    %v514 = vpop.permute.xlu0 %513
    %v516 = vmul.f32 %v498, %v514
    %518 = vrot.lane.b32.xlu0 %v516, 32
    %v519 = vpop.permute.xlu0 %518
    %s521 = scalar_lea.vmem [#allocation4], 6
    %522 = vst.msk [vmem:[%s521] sm:$0x3] %vm179, %v519
    %s523 = scalar_lea.vmem %s0, 8
    %v524 = vld [vmem:[%s523] sm:$0x3]
    %v526 = vsel %vm48, %v524, 0
    %528 = vmatpush.msra.mxu0 0.0
    %529 = vmatpush.msra.mxu0 0.0
    %530 = vmatpush.msra.mxu0 0.0
    %531 = vmatpush.msra.mxu0 0.0
    %532 = vmatpush.msra.mxu0 0.0
    %533 = vmatpush.msra.mxu0 0.0
    %534 = vmatpush.msra.mxu0 0.0
    %535 = vmatpush.msra.mxu0 0.0
    %536 = vmatpush.msra.mxu0 0.0
    %537 = vmatpush.msra.mxu0 0.0
    %538 = vmatpush.msra.mxu0 0.0
    %539 = vmatpush.msra.mxu0 0.0
    %540 = vmatpush.msra.mxu0 0.0
    %541 = vmatpush.msra.mxu0 0.0
    %542 = vmatpush.msra.mxu0 0.0
    %543 = vmatpush.msra.mxu0 %v54
    %544 = vmatmul.f32.gmra.mxu0 %v526
    %v545 = vpop.f32.mrf.mxu0
    %v546 = vadd.f32 0.0, %v545
    %547 = vdwg.mxu0
    %v548 = vsel %vm76, %v519, 0
    %550 = vmatpush.msra.mxu0 0.0
    %551 = vmatpush.msra.mxu0 0.0
    %552 = vmatpush.msra.mxu0 0.0
    %553 = vmatpush.msra.mxu0 0.0
    %554 = vmatpush.msra.mxu0 0.0
    %555 = vmatpush.msra.mxu0 0.0
    %556 = vmatpush.msra.mxu0 0.0
    %557 = vmatpush.msra.mxu0 0.0
    %558 = vmatpush.msra.mxu0 0.0
    %559 = vmatpush.msra.mxu0 0.0
    %560 = vmatpush.msra.mxu0 0.0
    %561 = vmatpush.msra.mxu0 0.0
    %562 = vmatpush.msra.mxu0 %v38
    %563 = vmatpush.msra.mxu0 %v37
    %564 = vmatpush.msra.mxu0 %v36
    %565 = vmatpush.msra.mxu0 %v35
    %566 = vmatmul.f32.gmra.mxu0 %v548
    %v567 = vpop.f32.mrf.mxu0
    %v568 = vadd.f32 %v546, %v567
    %569 = vdwg.mxu0
    %v570 = vadd.f32 %v568, %v101
    %v572 = vsel %vm107, %v570, 0
    %574 = vmatpush.msra.mxu0 0.0
    %575 = vmatpush.msra.mxu0 0.0
    %576 = vmatpush.msra.mxu0 0.0
    %577 = vmatpush.msra.mxu0 0.0
    %578 = vmatpush.msra.mxu0 0.0
    %579 = vmatpush.msra.mxu0 0.0
    %580 = vmatpush.msra.mxu0 0.0
    %581 = vmatpush.msra.mxu0 0.0
    %582 = vmatpush.msra.mxu0 0.0
    %583 = vmatpush.msra.mxu0 0.0
    %584 = vmatpush.msra.mxu0 0.0
    %585 = vmatpush.msra.mxu0 0.0
    %586 = vmatpush.msra.mxu0 0.0
    %587 = vmatpush.msra.mxu0 %v112
    %588 = vmatpush.msra.mxu0 %v42
    %589 = vmatpush.msra.mxu0 %v41
    %590 = vmatmul.f32.gmra.mxu0 %v572
    %v591 = vpop.f32.mrf.mxu0
    %v592 = vadd.f32 %v105, %v591
    %593 = vdwg.mxu0
    %v594 = vxor.u32 %v592, 2147483648
    %v595 = vmul.f32 %v594, 1.442695
    %v596 = vpow.pop %v595
    %v597 = vadd.f32 %v596, 1.0
    %v598 = vrcp.pop %v597
    %v599 = vmul.f32 %v597, %v598
    %v600 = vsub.f32 1.0, %v599
    %v601 = vmul.f32 %v598, %v600
    %v602 = vadd.f32 %v598, %v601
    %vm603 = vweird.f32 %v597
    %vm604 = vweird.f32 %v598
    %vm605 = vmor %vm603, %vm604
    %v606 = vsel %vm605, %v598, %v602
    %v607 = vand.u32 2147483647, %v597
    %vm608 = vcmp.eq.f32.partialorder %v607, 8.507059e+37
    %v609 = vand.u32 %v597, 2147483648
    %v610 = vor.u32 1.1754944e-38, %v609
    %v611 = vsel %vm608, %v610, %v606
    %v612 = vmul.f32 1.0, %v611
    %v613 = vtanh.pop %v592
    %v614 = vmul.f32 %v612, %v510
    %616 = vrot.lane.b32.xlu0 %v613, 64
    %v617 = vpop.permute.xlu0 %616
    %v619 = vmul.f32 %v612, %v617
    %621 = vrot.lane.b32.xlu0 %v619, 32
    %v622 = vpop.permute.xlu0 %621
    %v624 = vadd.f32 %v614, %v622
    %v625 = vtanh.pop %v624
    %627 = vrot.lane.b32.xlu0 %v625, 64
    %v628 = vpop.permute.xlu0 %627
    %v630 = vmul.f32 %v612, %v628
    %632 = vrot.lane.b32.xlu0 %v630, 32
    %v633 = vpop.permute.xlu0 %632
    %s635 = scalar_lea.vmem [#allocation4], 8
    %636 = vst.msk [vmem:[%s635] sm:$0x3] %vm179, %v633
    %s637 = scalar_lea.vmem %s0, 10
    %v638 = vld [vmem:[%s637] sm:$0x3]
    %v640 = vsel %vm48, %v638, 0
    %642 = vmatpush.msra.mxu0 0.0
    %643 = vmatpush.msra.mxu0 0.0
    %644 = vmatpush.msra.mxu0 0.0
    %645 = vmatpush.msra.mxu0 0.0
    %646 = vmatpush.msra.mxu0 0.0
    %647 = vmatpush.msra.mxu0 0.0
    %648 = vmatpush.msra.mxu0 0.0
    %649 = vmatpush.msra.mxu0 0.0
    %650 = vmatpush.msra.mxu0 0.0
    %651 = vmatpush.msra.mxu0 0.0
    %652 = vmatpush.msra.mxu0 0.0
    %653 = vmatpush.msra.mxu0 0.0
    %654 = vmatpush.msra.mxu0 0.0
    %655 = vmatpush.msra.mxu0 0.0
    %656 = vmatpush.msra.mxu0 0.0
    %657 = vmatpush.msra.mxu0 %v54
    %658 = vmatmul.f32.gmra.mxu0 %v640
    %v659 = vpop.f32.mrf.mxu0
    %v660 = vadd.f32 0.0, %v659
    %661 = vdwg.mxu0
    %v662 = vsel %vm76, %v633, 0
    %664 = vmatpush.msra.mxu0 0.0
    %665 = vmatpush.msra.mxu0 0.0
    %666 = vmatpush.msra.mxu0 0.0
    %667 = vmatpush.msra.mxu0 0.0
    %668 = vmatpush.msra.mxu0 0.0
    %669 = vmatpush.msra.mxu0 0.0
    %670 = vmatpush.msra.mxu0 0.0
    %671 = vmatpush.msra.mxu0 0.0
    %672 = vmatpush.msra.mxu0 0.0
    %673 = vmatpush.msra.mxu0 0.0
    %674 = vmatpush.msra.mxu0 0.0
    %675 = vmatpush.msra.mxu0 0.0
    %676 = vmatpush.msra.mxu0 %v38
    %677 = vmatpush.msra.mxu0 %v37
    %678 = vmatpush.msra.mxu0 %v36
    %679 = vmatpush.msra.mxu0 %v35
    %680 = vmatmul.f32.gmra.mxu0 %v662
    %v681 = vpop.f32.mrf.mxu0
    %v682 = vadd.f32 %v660, %v681
    %683 = vdwg.mxu0
    %v684 = vadd.f32 %v682, %v101
    %v686 = vsel %vm107, %v684, 0
    %688 = vmatpush.msra.mxu0 0.0
    %689 = vmatpush.msra.mxu0 0.0
    %690 = vmatpush.msra.mxu0 0.0
    %691 = vmatpush.msra.mxu0 0.0
    %692 = vmatpush.msra.mxu0 0.0
    %693 = vmatpush.msra.mxu0 0.0
    %694 = vmatpush.msra.mxu0 0.0
    %695 = vmatpush.msra.mxu0 0.0
    %696 = vmatpush.msra.mxu0 0.0
    %697 = vmatpush.msra.mxu0 0.0
    %698 = vmatpush.msra.mxu0 0.0
    %699 = vmatpush.msra.mxu0 0.0
    %700 = vmatpush.msra.mxu0 0.0
    %701 = vmatpush.msra.mxu0 %v112
    %702 = vmatpush.msra.mxu0 %v42
    %703 = vmatpush.msra.mxu0 %v41
    %704 = vmatmul.f32.gmra.mxu0 %v686
    %v705 = vpop.f32.mrf.mxu0
    %v706 = vadd.f32 %v105, %v705
    %707 = vdwg.mxu0
    %v708 = vxor.u32 %v706, 2147483648
    %v709 = vmul.f32 %v708, 1.442695
    %v710 = vpow.pop %v709
    %v711 = vadd.f32 %v710, 1.0
    %v712 = vrcp.pop %v711
    %v713 = vmul.f32 %v711, %v712
    %v714 = vsub.f32 1.0, %v713
    %v715 = vmul.f32 %v712, %v714
    %v716 = vadd.f32 %v712, %v715
    %vm717 = vweird.f32 %v711
    %vm718 = vweird.f32 %v712
    %vm719 = vmor %vm717, %vm718
    %v720 = vsel %vm719, %v712, %v716
    %v721 = vand.u32 2147483647, %v711
    %vm722 = vcmp.eq.f32.partialorder %v721, 8.507059e+37
    %v723 = vand.u32 %v711, 2147483648
    %v724 = vor.u32 1.1754944e-38, %v723
    %v725 = vsel %vm722, %v724, %v720
    %v726 = vmul.f32 1.0, %v725
    %v727 = vtanh.pop %v706
    %v728 = vmul.f32 %v726, %v624
    %730 = vrot.lane.b32.xlu0 %v727, 64
    %v731 = vpop.permute.xlu0 %730
    %v733 = vmul.f32 %v726, %v731
    %735 = vrot.lane.b32.xlu0 %v733, 32
    %v736 = vpop.permute.xlu0 %735
    %v738 = vadd.f32 %v728, %v736
    %v739 = vtanh.pop %v738
    %741 = vrot.lane.b32.xlu0 %v739, 64
    %v742 = vpop.permute.xlu0 %741
    %v744 = vmul.f32 %v726, %v742
    %746 = vrot.lane.b32.xlu0 %v744, 32
    %v747 = vpop.permute.xlu0 %746
    %s749 = scalar_lea.vmem [#allocation4], 10
    %750 = vst.msk [vmem:[%s749] sm:$0x3] %vm179, %v747
    %s751 = scalar_lea.vmem %s0, 12
    %v752 = vld [vmem:[%s751] sm:$0x3]
    %v754 = vsel %vm48, %v752, 0
    %756 = vmatpush.msra.mxu0 0.0
    %757 = vmatpush.msra.mxu0 0.0
    %758 = vmatpush.msra.mxu0 0.0
    %759 = vmatpush.msra.mxu0 0.0
    %760 = vmatpush.msra.mxu0 0.0
    %761 = vmatpush.msra.mxu0 0.0
    %762 = vmatpush.msra.mxu0 0.0
    %763 = vmatpush.msra.mxu0 0.0
    %764 = vmatpush.msra.mxu0 0.0
    %765 = vmatpush.msra.mxu0 0.0
    %766 = vmatpush.msra.mxu0 0.0
    %767 = vmatpush.msra.mxu0 0.0
    %768 = vmatpush.msra.mxu0 0.0
    %769 = vmatpush.msra.mxu0 0.0
    %770 = vmatpush.msra.mxu0 0.0
    %771 = vmatpush.msra.mxu0 %v54
    %772 = vmatmul.f32.gmra.mxu0 %v754
    %v773 = vpop.f32.mrf.mxu0
    %v774 = vadd.f32 0.0, %v773
    %775 = vdwg.mxu0
    %v776 = vsel %vm76, %v747, 0
    %778 = vmatpush.msra.mxu0 0.0
    %779 = vmatpush.msra.mxu0 0.0
    %780 = vmatpush.msra.mxu0 0.0
    %781 = vmatpush.msra.mxu0 0.0
    %782 = vmatpush.msra.mxu0 0.0
    %783 = vmatpush.msra.mxu0 0.0
    %784 = vmatpush.msra.mxu0 0.0
    %785 = vmatpush.msra.mxu0 0.0
    %786 = vmatpush.msra.mxu0 0.0
    %787 = vmatpush.msra.mxu0 0.0
    %788 = vmatpush.msra.mxu0 0.0
    %789 = vmatpush.msra.mxu0 0.0
    %790 = vmatpush.msra.mxu0 %v38
    %791 = vmatpush.msra.mxu0 %v37
    %792 = vmatpush.msra.mxu0 %v36
    %793 = vmatpush.msra.mxu0 %v35
    %794 = vmatmul.f32.gmra.mxu0 %v776
    %v795 = vpop.f32.mrf.mxu0
    %v796 = vadd.f32 %v774, %v795
    %797 = vdwg.mxu0
    %v798 = vadd.f32 %v796, %v101
    %v800 = vsel %vm107, %v798, 0
    %802 = vmatpush.msra.mxu0 0.0
    %803 = vmatpush.msra.mxu0 0.0
    %804 = vmatpush.msra.mxu0 0.0
    %805 = vmatpush.msra.mxu0 0.0
    %806 = vmatpush.msra.mxu0 0.0
    %807 = vmatpush.msra.mxu0 0.0
    %808 = vmatpush.msra.mxu0 0.0
    %809 = vmatpush.msra.mxu0 0.0
    %810 = vmatpush.msra.mxu0 0.0
    %811 = vmatpush.msra.mxu0 0.0
    %812 = vmatpush.msra.mxu0 0.0
    %813 = vmatpush.msra.mxu0 0.0
    %814 = vmatpush.msra.mxu0 0.0
    %815 = vmatpush.msra.mxu0 %v112
    %816 = vmatpush.msra.mxu0 %v42
    %817 = vmatpush.msra.mxu0 %v41
    %818 = vmatmul.f32.gmra.mxu0 %v800
    %v819 = vpop.f32.mrf.mxu0
    %v820 = vadd.f32 %v105, %v819
    %821 = vdwg.mxu0
    %v822 = vxor.u32 %v820, 2147483648
    %v823 = vmul.f32 %v822, 1.442695
    %v824 = vpow.pop %v823
    %v825 = vadd.f32 %v824, 1.0
    %v826 = vrcp.pop %v825
    %v827 = vmul.f32 %v825, %v826
    %v828 = vsub.f32 1.0, %v827
    %v829 = vmul.f32 %v826, %v828
    %v830 = vadd.f32 %v826, %v829
    %vm831 = vweird.f32 %v825
    %vm832 = vweird.f32 %v826
    %vm833 = vmor %vm831, %vm832
    %v834 = vsel %vm833, %v826, %v830
    %v835 = vand.u32 2147483647, %v825
    %vm836 = vcmp.eq.f32.partialorder %v835, 8.507059e+37
    %v837 = vand.u32 %v825, 2147483648
    %v838 = vor.u32 1.1754944e-38, %v837
    %v839 = vsel %vm836, %v838, %v834
    %v840 = vmul.f32 1.0, %v839
    %v841 = vtanh.pop %v820
    %v842 = vmul.f32 %v840, %v738
    %844 = vrot.lane.b32.xlu0 %v841, 64
    %v845 = vpop.permute.xlu0 %844
    %v847 = vmul.f32 %v840, %v845
    %849 = vrot.lane.b32.xlu0 %v847, 32
    %v850 = vpop.permute.xlu0 %849
    %v852 = vadd.f32 %v842, %v850
    %v853 = vtanh.pop %v852
    %855 = vrot.lane.b32.xlu0 %v853, 64
    %v856 = vpop.permute.xlu0 %855
    %v858 = vmul.f32 %v840, %v856
    %860 = vrot.lane.b32.xlu0 %v858, 32
    %v861 = vpop.permute.xlu0 %860
    %s863 = scalar_lea.vmem [#allocation4], 12
    %864 = vst.msk [vmem:[%s863] sm:$0x3] %vm179, %v861
    %s865 = scalar_lea.vmem %s0, 14
    %v866 = vld [vmem:[%s865] sm:$0x3]
    %v868 = vsel %vm48, %v866, 0
    %870 = vmatpush.msra.mxu0 0.0
    %871 = vmatpush.msra.mxu0 0.0
    %872 = vmatpush.msra.mxu0 0.0
    %873 = vmatpush.msra.mxu0 0.0
    %874 = vmatpush.msra.mxu0 0.0
    %875 = vmatpush.msra.mxu0 0.0
    %876 = vmatpush.msra.mxu0 0.0
    %877 = vmatpush.msra.mxu0 0.0
    %878 = vmatpush.msra.mxu0 0.0
    %879 = vmatpush.msra.mxu0 0.0
    %880 = vmatpush.msra.mxu0 0.0
    %881 = vmatpush.msra.mxu0 0.0
    %882 = vmatpush.msra.mxu0 0.0
    %883 = vmatpush.msra.mxu0 0.0
    %884 = vmatpush.msra.mxu0 0.0
    %885 = vmatpush.msra.mxu0 %v54
    %886 = vmatmul.f32.gmra.mxu0 %v868
    %v887 = vpop.f32.mrf.mxu0
    %v888 = vadd.f32 0.0, %v887
    %889 = vdwg.mxu0
    %v890 = vsel %vm76, %v861, 0
    %892 = vmatpush.msra.mxu0 0.0
    %893 = vmatpush.msra.mxu0 0.0
    %894 = vmatpush.msra.mxu0 0.0
    %895 = vmatpush.msra.mxu0 0.0
    %896 = vmatpush.msra.mxu0 0.0
    %897 = vmatpush.msra.mxu0 0.0
    %898 = vmatpush.msra.mxu0 0.0
    %899 = vmatpush.msra.mxu0 0.0
    %900 = vmatpush.msra.mxu0 0.0
    %901 = vmatpush.msra.mxu0 0.0
    %902 = vmatpush.msra.mxu0 0.0
    %903 = vmatpush.msra.mxu0 0.0
    %904 = vmatpush.msra.mxu0 %v38
    %905 = vmatpush.msra.mxu0 %v37
    %906 = vmatpush.msra.mxu0 %v36
    %907 = vmatpush.msra.mxu0 %v35
    %908 = vmatmul.f32.gmra.mxu0 %v890
    %v909 = vpop.f32.mrf.mxu0
    %v910 = vadd.f32 %v888, %v909
    %911 = vdwg.mxu0
    %v912 = vadd.f32 %v910, %v101
    %v914 = vsel %vm107, %v912, 0
    %916 = vmatpush.msra.mxu0 0.0
    %917 = vmatpush.msra.mxu0 0.0
    %918 = vmatpush.msra.mxu0 0.0
    %919 = vmatpush.msra.mxu0 0.0
    %920 = vmatpush.msra.mxu0 0.0
    %921 = vmatpush.msra.mxu0 0.0
    %922 = vmatpush.msra.mxu0 0.0
    %923 = vmatpush.msra.mxu0 0.0
    %924 = vmatpush.msra.mxu0 0.0
    %925 = vmatpush.msra.mxu0 0.0
    %926 = vmatpush.msra.mxu0 0.0
    %927 = vmatpush.msra.mxu0 0.0
    %928 = vmatpush.msra.mxu0 0.0
    %929 = vmatpush.msra.mxu0 %v112
    %930 = vmatpush.msra.mxu0 %v42
    %931 = vmatpush.msra.mxu0 %v41
    %932 = vmatmul.f32.gmra.mxu0 %v914
    %v933 = vpop.f32.mrf.mxu0
    %v934 = vadd.f32 %v105, %v933
    %935 = vdwg.mxu0
    %v936 = vxor.u32 %v934, 2147483648
    %v937 = vmul.f32 %v936, 1.442695
    %v938 = vpow.pop %v937
    %v939 = vadd.f32 %v938, 1.0
    %v940 = vrcp.pop %v939
    %v941 = vmul.f32 %v939, %v940
    %v942 = vsub.f32 1.0, %v941
    %v943 = vmul.f32 %v940, %v942
    %v944 = vadd.f32 %v940, %v943
    %vm945 = vweird.f32 %v939
    %vm946 = vweird.f32 %v940
    %vm947 = vmor %vm945, %vm946
    %v948 = vsel %vm947, %v940, %v944
    %v949 = vand.u32 2147483647, %v939
    %vm950 = vcmp.eq.f32.partialorder %v949, 8.507059e+37
    %v951 = vand.u32 %v939, 2147483648
    %v952 = vor.u32 1.1754944e-38, %v951
    %v953 = vsel %vm950, %v952, %v948
    %v954 = vmul.f32 1.0, %v953
    %v955 = vtanh.pop %v934
    %v956 = vmul.f32 %v954, %v852
    %958 = vrot.lane.b32.xlu0 %v955, 64
    %v959 = vpop.permute.xlu0 %958
    %v961 = vmul.f32 %v954, %v959
    %963 = vrot.lane.b32.xlu0 %v961, 32
    %v964 = vpop.permute.xlu0 %963
    %v966 = vadd.f32 %v956, %v964
    %v967 = vtanh.pop %v966
    %969 = vrot.lane.b32.xlu0 %v967, 64
    %v970 = vpop.permute.xlu0 %969
    %v972 = vmul.f32 %v954, %v970
    %974 = vrot.lane.b32.xlu0 %v972, 32
    %v975 = vpop.permute.xlu0 %974
    %s977 = scalar_lea.vmem [#allocation4], 14
    %978 = vst.msk [vmem:[%s977] sm:$0x3] %vm179, %v975
    %979 = vst.msk [vmem:[#allocation2] sm:$0x3] %vm179, %v975
    %981 = vrot.lane.b32.xlu0 %v966, 96
    %v982 = vpop.permute.xlu0 %981
    %984 = vst.msk [vmem:[#allocation3] sm:$0x3] %vm179, %v982
    %985 = vst.msk [vmem:[#allocation6] sm:$0x3] %vm179, %v975
    %986 = vst.msk [vmem:[#allocation8] sm:$0x3] %vm179, %v982
    // Predicated region
    $region30: #{tpu_custom_call.1} parent=1 // pred_check
      _
    $region31: #{tpu_custom_call.1} parent=1 // pred_check_branch
      %988 = sbr.rel (0) target = $region33
    $region32: #{tpu_custom_call.1} parent=1 // pred_region
      %990 = vsyncadd [#allocation5], 0
      %s991 = sshll.u32 [#allocation4], 4
      %s992 = int_to_ptr.vmem [resolvable:$true] %s991
      %s993 = sshll.u32 %s6, 4
      %s994 = int_to_ptr.hbm [resolvable:$true] %s993
      %999 = dma.vmem_to_hbm [thread:$0]  %s992, 256, %s994, [#allocation5], 32, 32, 2
    $region33: #{tpu_custom_call.1} parent=1 // pred_fallthru
      _
    // Predicated region
    $region34: #{tpu_custom_call.1} parent=1 // pred_check
      _
    $region35: #{tpu_custom_call.1} parent=1 // pred_check_branch
      %1001 = sbr.rel (0) target = $region37
    $region36: #{tpu_custom_call.1} parent=1 // pred_region
      %1003 = vsyncadd [#allocation7], 0
      %s1005 = sshll.u32 [#allocation6], 4
      %s1006 = int_to_ptr.vmem [resolvable:$true] %s1005
      %s1007 = sshll.u32 %s7, 4
      %s1008 = int_to_ptr.hbm [resolvable:$true] %s1007
      %1010 = dma.vmem_to_hbm [thread:$0]  %s1006, 32, %s1008, [#allocation7]
    $region37: #{tpu_custom_call.1} parent=1 // pred_fallthru
      _
    // Predicated region
    $region38: #{tpu_custom_call.1} parent=1 // pred_check
      _
    $region39: #{tpu_custom_call.1} parent=1 // pred_check_branch
      %1012 = sbr.rel (0) target = $region41
    $region40: #{tpu_custom_call.1} parent=1 // pred_region
      %1014 = vsyncadd [#allocation7], 0
      %s1016 = sshll.u32 [#allocation8], 4
      %s1017 = int_to_ptr.vmem [resolvable:$true] %s1016
      %s1018 = sshll.u32 %s8, 4
      %s1019 = int_to_ptr.hbm [resolvable:$true] %s1018
      %1021 = dma.vmem_to_hbm [thread:$0]  %s1017, 32, %s1019, [#allocation7]
    $region41: #{tpu_custom_call.1} parent=1 // pred_fallthru
      _
    // Predicated region
    $region42: #{tpu_custom_call.1} parent=1 // pred_check
      _
    $region43: #{tpu_custom_call.1} parent=1 // pred_check_branch
      %1023 = sbr.rel (0) target = $region45
    $region44: #{tpu_custom_call.1} parent=1 // pred_region
      %1025 = dma.done [#allocation5], 256
    $region45: #{tpu_custom_call.1} parent=1 // pred_fallthru
      _
    // Predicated region
    $region46: #{tpu_custom_call.1} parent=1 // pred_check
      _
    $region47: #{tpu_custom_call.1} parent=1 // pred_check_branch
      %1027 = sbr.rel (0) target = $region49
    $region48: #{tpu_custom_call.1} parent=1 // pred_region
      %1029 = dma.done [#allocation7], 32
    $region49: #{tpu_custom_call.1} parent=1 // pred_fallthru
      _
    // Predicated region
    $region50: #{tpu_custom_call.1} parent=1 // pred_check
      _
    $region51: #{tpu_custom_call.1} parent=1 // pred_check_branch
      %1031 = sbr.rel (0) target = $region53
    $region52: #{tpu_custom_call.1} parent=1 // pred_region
      %1033 = dma.done [#allocation7], 32
    $region53: #{tpu_custom_call.1} parent=1 // pred_fallthru
      _
    %1034 = vsyncpa [#allocation5], 1
    %1035 = vsyncpa [#allocation7], 1

</llo_original>
